<compile_context>
chip_gen: v6e
topology: v6e:2x2x1
jax: 0.10.0
libtpu: 0.0.40
codegen_flags: <defaults>
</compile_context>

<pallas_src>
import functools

import jax
import jax.numpy as jnp
from jax import lax
from jax.experimental import pallas as pl
from jax.experimental.pallas import tpu as pltpu

DIL = 4  # dilation == padding of the two dilated 3x3 convs


def spatial_gate_kernel(x_ref, w0_ref, b0_ref, w1_ref, b1_ref, w2_ref, b2_ref,
                        wf_ref, bf_ref, masks_ref, out_ref, col_ref, *, W):
    # x_ref / out_ref : [TB, C, HW]        lane-dense VMEM blocks
    # w0_ref          : [Cmp, C]           1x1 reduce conv (BN folded), pad rows 0
    # b0/b1/b2/wf     : [Cmp, 1]           VMEM columns (BN folded), pad rows 0
    # w1/w2           : [Cmp, 9*Cmp]       im2col weight matrices (BN folded)
    # bf_ref          : [1] SMEM scalar
    # masks_ref       : [9, TI*Cmp, HW]    per-tap boundary masks (pre-broadcast)
    # col_ref         : [TI, 9*Cmp, HW]    im2col scratch (reused by both convs)
    TB, C, HW = x_ref.shape
    Cmp = w0_ref.shape[0]
    TI = col_ref.shape[0]
    NK = 9

    # ---- hoisted, chunk-loop-invariant values ----------------------------
    w0b = jnp.broadcast_to(w0_ref[...], (TI, Cmp, C))
    w1b = jnp.broadcast_to(w1_ref[...], (TI, Cmp, NK * Cmp))
    w2b = jnp.broadcast_to(w2_ref[...], (TI, Cmp, NK * Cmp))
    b0c = b0_ref[...][None, :, :]            # [1, Cmp, 1]
    b1c = b1_ref[...][None, :, :]
    b2c = b2_ref[...][None, :, :]
    wfc = wf_ref[...][None, :, :]
    bf = bf_ref[0]

    # lane shift for each tap (kh, kw); masks zero out-of-image reads.
    shifts = []
    for kh in range(3):
        for kw in range(3):
            delta = (kh - 1) * DIL * W + (kw - 1) * DIL
            shifts.append((-delta) % HW)

    def dilated_conv(h, wb, bc):
        # h: [TI, Cmp, HW] -> relu(dilated 3x3 conv + bias), im2col on the MXU
        h2d = h.reshape(TI * Cmp, HW)
        for k in range(NK):
            s = shifts[k]
            tap = h2d if s == 0 else pltpu.roll(h2d, s, 1)
            if k != 4:                       # center tap needs no boundary mask
                tap = tap * masks_ref[k]
            col_ref[:, k * Cmp:(k + 1) * Cmp, :] = tap.reshape(TI, Cmp, HW)
        out = jnp.einsum('tok,tkp->top', wb, col_ref[...],
                         preferred_element_type=jnp.float32)
        return jnp.maximum(out + bc, 0.0)

    def chunk(i, carry):
        r = pl.multiple_of(i * TI, TI)
        xf = x_ref[pl.ds(r, TI)].astype(jnp.float32)          # [TI, C, HW]

        # gate_s_conv_reduce0 (1x1) + folded BN + ReLU  -> batched MXU matmul
        h0 = jnp.einsum('toc,tcp->top', w0b, xf,
                        preferred_element_type=jnp.float32)
        h0 = jnp.maximum(h0 + b0c, 0.0)                       # [TI, Cmp, HW]

        # gate_s_conv_di_0 / _1 (3x3, dilation=4, padding=4) + BN + ReLU
        h1 = dilated_conv(h0, w1b, b1c)
        h2 = dilated_conv(h1, w2b, b2c)

        # gate_s_conv_final (1x1 -> 1 channel), gate = 1 + sigmoid, multiply
        logits = jnp.sum(h2 * wfc, axis=1, keepdims=True) + bf  # [TI, 1, HW]
        att = 1.0 + jax.nn.sigmoid(logits)
        out_ref[pl.ds(r, TI)] = (att * xf).astype(out_ref.dtype)
        return carry

    lax.fori_loop(0, TB // TI, chunk, 0)


def _pick_tb(n, bytes_per_elem, target_bytes=1 << 20):
    """Batch elements per grid block: ~1 MiB blocks, >=2 grid steps, divides N."""
    tb = max(1, min(n, target_bytes // max(1, bytes_per_elem)))
    if n >= 2:
        tb = min(tb, max(1, n // 2))          # >= 2 grid steps (v7x megacore)
    while n % tb:
        tb -= 1
    if tb >= 8 and n % ((tb // 8) * 8) == 0:
        tb = (tb // 8) * 8                    # full-sublane inner chunks (TI=8)
    return tb


def spatial_gate(x, params):
    """x: [N, C, H, W] (NCHW, like PyTorch). Returns same shape/dtype."""
    N, C, H, W = x.shape
    HW = H * W
    Cmp = params["w0"].shape[0]

    x2 = x.reshape(N, C, HW)                  # lane-dense layout, no transpose
    tb = _pick_tb(N, C * HW * x.dtype.itemsize)
    ti = 1
    for cand in (8, 4, 2):
        if tb % cand == 0:
            ti = cand
            break

    # per-tap boundary masks (zero padding of the dilated convs), pre-broadcast
    # to the [TI*Cmp, HW] slab the kernel multiplies with.
    p = jnp.arange(HW, dtype=jnp.int32)
    hh, ww = p // W, p % W
    rows = []
    for kh in range(3):
        for kw in range(3):
            dh, dw = (kh - 1) * DIL, (kw - 1) * DIL
            valid = ((hh + dh >= 0) & (hh + dh < H) &
                     (ww + dw >= 0) & (ww + dw < W))
            rows.append(valid.astype(jnp.float32))
    masks = jnp.broadcast_to(jnp.stack(rows)[:, None, :], (9, ti * Cmp, HW))

    img_spec = pl.BlockSpec((tb, C, HW), lambda n: (n, 0, 0))
    smem_spec = pl.BlockSpec(memory_space=pltpu.MemorySpace.SMEM)

    def vmem_full(arr):
        nd = arr.ndim
        return pl.BlockSpec(arr.shape, lambda n, _nd=nd: (0,) * _nd)

    kernel = functools.partial(spatial_gate_kernel, W=W)

    out2 = pl.pallas_call(
        kernel,
        out_shape=jax.ShapeDtypeStruct((N, C, HW), x.dtype),
        grid_spec=pltpu.PrefetchScalarGridSpec(
            num_scalar_prefetch=0,
            grid=(N // tb,),
            in_specs=[
                img_spec,
                vmem_full(params["w0"]), vmem_full(params["b0"]),
                vmem_full(params["w1"]), vmem_full(params["b1"]),
                vmem_full(params["w2"]), vmem_full(params["b2"]),
                vmem_full(params["wf"]), smem_spec,
                vmem_full(masks),
            ],
            out_specs=img_spec,
            scratch_shapes=[pltpu.VMEM((ti, 9 * Cmp, HW), jnp.float32)],
        ),
        compiler_params=pltpu.CompilerParams(
            dimension_semantics=("parallel",)),
    )(x2, params["w0"], params["b0"], params["w1"], params["b1"],
      params["w2"], params["b2"], params["wf"], params["bf"], masks)

    return out2.reshape(N, C, H, W)


# ---------------- parameter prep (fold eval-mode BN, plain-JAX glue) --------
def pack_params(W0, b0, W1, b1, W2, b2, Wf, bf, bn0, bn1, bn2, eps=1e-5):
    def fold(Wc, bc, bn):
        g, be, m, v = bn
        s = g / jnp.sqrt(v + eps)
        return Wc * s[:, None, None, None], (bc - m) * s + be

    W0f, b0f = fold(W0, b0, bn0)
    W1f, b1f = fold(W1, b1, bn1)
    W2f, b2f = fold(W2, b2, bn2)

    Cm, C = W0f.shape[0], W0f.shape[1]
    Cmp = ((Cm + 7) // 8) * 8                 # pad channels to full sublanes

    def dil_mat(Wc):
        # [Cmp, 9*Cmp] with m[co, (kh*3+kw)*Cmp + ci] = Wc[co, ci, kh, kw]
        m = jnp.zeros((Cmp, 9, Cmp), jnp.float32)
        m = m.at[:Cm, :, :Cm].set(
            jnp.transpose(Wc, (0, 2, 3, 1)).reshape(Cm, 9, Cm))
        return m.reshape(Cmp, 9 * Cmp)

    def col(v):
        return jnp.zeros((Cmp, 1), jnp.float32).at[:Cm, 0].set(
            v.astype(jnp.float32))

    return dict(
        w0=jnp.zeros((Cmp, C), jnp.float32).at[:Cm].set(W0f[:, :, 0, 0]),
        b0=col(b0f),
        w1=dil_mat(W1f), b1=col(b1f),
        w2=dil_mat(W2f), b2=col(b2f),
        wf=col(Wf[0, :, 0, 0]),
        bf=bf.astype(jnp.float32).reshape(1),
    )


# ---------------- pure-JAX reference (for correctness check) ----------------
def reference(x, W0, b0, W1, b1, W2, b2, Wf, bf, bn0, bn1, bn2, eps=1e-5):
    dn = ("NCHW", "OIHW", "NCHW")

    def bn(y, p):
        g, be, m, v = p
        sh = (1, -1, 1, 1)
        return (y - m.reshape(sh)) / jnp.sqrt(v.reshape(sh) + eps) \
            * g.reshape(sh) + be.reshape(sh)

    y = jax.lax.conv_general_dilated(x, W0, (1, 1), "VALID",
                                     dimension_numbers=dn) + b0.reshape(1, -1, 1, 1)
    y = jax.nn.relu(bn(y, bn0))
    y = jax.lax.conv_general_dilated(y, W1, (1, 1), [(DIL, DIL), (DIL, DIL)],
                                     rhs_dilation=(DIL, DIL),
                                     dimension_numbers=dn) + b1.reshape(1, -1, 1, 1)
    y = jax.nn.relu(bn(y, bn1))
    y = jax.lax.conv_general_dilated(y, W2, (1, 1), [(DIL, DIL), (DIL, DIL)],
                                     rhs_dilation=(DIL, DIL),
                                     dimension_numbers=dn) + b2.reshape(1, -1, 1, 1)
    y = jax.nn.relu(bn(y, bn2))
    y = jax.lax.conv_general_dilated(y, Wf, (1, 1), "VALID",
                                     dimension_numbers=dn) + bf.reshape(1, -1, 1, 1)
    att = 1.0 + jax.nn.sigmoid(y)             # [N,1,H,W] -> broadcast over C
    return att * x


if __name__ == "__main__":
    key = jax.random.PRNGKey(0)
    N, C, H, W = 2, 32, 16, 16
    reduction_ratio = 16
    Cm = C // reduction_ratio
    eps = 1e-5

    keys = jax.random.split(key, 16)
    x = jax.random.normal(keys[0], (N, C, H, W), jnp.float32)

    # PyTorch-shaped parameters, deterministic synthetic init
    W0 = jax.random.normal(keys[1], (Cm, C, 1, 1), jnp.float32) * 0.1
    b0 = jax.random.normal(keys[2], (Cm,), jnp.float32) * 0.1
    W1 = jax.random.normal(keys[3], (Cm, Cm, 3, 3), jnp.float32) * 0.1
    b1 = jax.random.normal(keys[4], (Cm,), jnp.float32) * 0.1
    W2 = jax.random.normal(keys[5], (Cm, Cm, 3, 3), jnp.float32) * 0.1
    b2 = jax.random.normal(keys[6], (Cm,), jnp.float32) * 0.1
    Wf = jax.random.normal(keys[7], (1, Cm, 1, 1), jnp.float32) * 0.1
    bf = jax.random.normal(keys[8], (1,), jnp.float32) * 0.1

    def bn_params(k):
        k1, k2, k3, k4 = jax.random.split(k, 4)
        gamma = jax.random.uniform(k1, (Cm,), minval=0.5, maxval=1.5)
        beta = jax.random.normal(k2, (Cm,)) * 0.1
        mean = jax.random.normal(k3, (Cm,)) * 0.1
        var = jax.random.uniform(k4, (Cm,), minval=0.5, maxval=1.5)
        return gamma, beta, mean, var

    bn0, bn1, bn2 = bn_params(keys[9]), bn_params(keys[10]), bn_params(keys[11])

    params = pack_params(W0, b0, W1, b1, W2, b2, Wf, bf, bn0, bn1, bn2, eps=eps)

    out = jax.block_until_ready(spatial_gate(x, params))

    ref = jax.block_until_ready(
        reference(x, W0, b0, W1, b1, W2, b2, Wf, bf, bn0, bn1, bn2, eps=eps))
    assert out.shape == x.shape and out.dtype == x.dtype
    assert jnp.allclose(out, ref, atol=2e-3, rtol=2e-3), \
        float(jnp.max(jnp.abs(out - ref)))
    print("KERNEL_OK")
</pallas_src>

<mosaic_0001>
module attributes {stable_mosaic.version = 11 : i64} {
  func.func @spatial_gate_kernel(%arg0: i32, %arg1: memref<1x32x256xf32, #tpu.memory_space<vmem>>, %arg2: memref<8x32xf32, #tpu.memory_space<vmem>>, %arg3: memref<8x1xf32, #tpu.memory_space<vmem>>, %arg4: memref<8x72xf32, #tpu.memory_space<vmem>>, %arg5: memref<8x1xf32, #tpu.memory_space<vmem>>, %arg6: memref<8x72xf32, #tpu.memory_space<vmem>>, %arg7: memref<8x1xf32, #tpu.memory_space<vmem>>, %arg8: memref<8x1xf32, #tpu.memory_space<vmem>>, %arg9: memref<1xf32, #tpu.memory_space<smem>>, %arg10: memref<9x8x256xf32, #tpu.memory_space<vmem>>, %arg11: memref<1x32x256xf32, #tpu.memory_space<vmem>>, %arg12: memref<1x72x256xf32, #tpu.memory_space<vmem>>) attributes {dimension_semantics = [#tpu.dimension_semantics<parallel>], iteration_bounds = array<i64: 2>, scalar_prefetch = 0 : i64, scratch_operands = 1 : i64, tpu.core_type = #tpu.core_type<tc>, window_params = [{transform_indices = @transform_0, window_bounds = array<i64: 1, 32, 256>}, {pipeline_mode = #tpu.pipeline_mode<synchronous>, transform_indices = @transform_1, window_bounds = array<i64: 8, 32>}, {pipeline_mode = #tpu.pipeline_mode<synchronous>, transform_indices = @transform_2, window_bounds = array<i64: 8, 1>}, {pipeline_mode = #tpu.pipeline_mode<synchronous>, transform_indices = @transform_3, window_bounds = array<i64: 8, 72>}, {pipeline_mode = #tpu.pipeline_mode<synchronous>, transform_indices = @transform_4, window_bounds = array<i64: 8, 1>}, {pipeline_mode = #tpu.pipeline_mode<synchronous>, transform_indices = @transform_5, window_bounds = array<i64: 8, 72>}, {pipeline_mode = #tpu.pipeline_mode<synchronous>, transform_indices = @transform_6, window_bounds = array<i64: 8, 1>}, {pipeline_mode = #tpu.pipeline_mode<synchronous>, transform_indices = @transform_7, window_bounds = array<i64: 8, 1>}, {transform_indices = @transform_8, window_bounds = array<i64: 1>}, {pipeline_mode = #tpu.pipeline_mode<synchronous>, transform_indices = @transform_9, window_bounds = array<i64: 9, 8, 256>}, {transform_indices = @transform_10, window_bounds = array<i64: 1, 32, 256>}]} {
    %c0 = arith.constant 0 : index
    %c0_0 = arith.constant 0 : index
    %0 = vector.load %arg2[%c0, %c0_0] : memref<8x32xf32, #tpu.memory_space<vmem>>, vector<8x32xf32>
    %1 = vector.shape_cast %0 : vector<8x32xf32> to vector<1x8x32xf32>
    %c0_1 = arith.constant 0 : index
    %c0_2 = arith.constant 0 : index
    %2 = vector.load %arg4[%c0_1, %c0_2] : memref<8x72xf32, #tpu.memory_space<vmem>>, vector<8x72xf32>
    %3 = vector.shape_cast %2 : vector<8x72xf32> to vector<1x8x72xf32>
    %c0_3 = arith.constant 0 : index
    %c0_4 = arith.constant 0 : index
    %4 = vector.load %arg6[%c0_3, %c0_4] : memref<8x72xf32, #tpu.memory_space<vmem>>, vector<8x72xf32>
    %5 = vector.shape_cast %4 : vector<8x72xf32> to vector<1x8x72xf32>
    %c0_5 = arith.constant 0 : index
    %c0_6 = arith.constant 0 : index
    %6 = vector.load %arg3[%c0_5, %c0_6] : memref<8x1xf32, #tpu.memory_space<vmem>>, vector<8x1xf32>
    %7 = vector.shape_cast %6 : vector<8x1xf32> to vector<1x8x1xf32>
    %c0_7 = arith.constant 0 : index
    %c0_8 = arith.constant 0 : index
    %8 = vector.load %arg5[%c0_7, %c0_8] : memref<8x1xf32, #tpu.memory_space<vmem>>, vector<8x1xf32>
    %9 = vector.shape_cast %8 : vector<8x1xf32> to vector<1x8x1xf32>
    %c0_9 = arith.constant 0 : index
    %c0_10 = arith.constant 0 : index
    %10 = vector.load %arg7[%c0_9, %c0_10] : memref<8x1xf32, #tpu.memory_space<vmem>>, vector<8x1xf32>
    %11 = vector.shape_cast %10 : vector<8x1xf32> to vector<1x8x1xf32>
    %c0_11 = arith.constant 0 : index
    %c0_12 = arith.constant 0 : index
    %12 = vector.load %arg8[%c0_11, %c0_12] : memref<8x1xf32, #tpu.memory_space<vmem>>, vector<8x1xf32>
    %13 = vector.shape_cast %12 : vector<8x1xf32> to vector<1x8x1xf32>
    %c0_13 = arith.constant 0 : index
    %14 = memref.load %arg9[%c0_13] : memref<1xf32, #tpu.memory_space<smem>>
    %c0_i32 = arith.constant 0 : i32
    %c1_i32 = arith.constant 1 : i32
    %15 = arith.muli %c0_i32, %c1_i32 : i32
    %16 = tpu.assume_multiple %15, 1 : i32
    %17 = arith.index_cast %16 : i32 to index
    %c0_14 = arith.constant 0 : index
    %c0_15 = arith.constant 0 : index
    %18 = vector.load %arg1[%17, %c0_14, %c0_15] : memref<1x32x256xf32, #tpu.memory_space<vmem>>, vector<1x32x256xf32>
    "tpu.trace_start"() <{level = 10 : i32, message = "toc,tcp->top"}> : () -> ()
    %cst = arith.constant dense<0.000000e+00> : vector<1x8x256xf32>
    %19 = tpu.matmul %1, %18, %cst {dimension_numbers = #tpu.dot_dimension_numbers<[2], [1], [1], [2], [0, 0, 0, 1, 1, 2], [0], [0]>} : vector<1x8x32xf32>, vector<1x32x256xf32>, vector<1x8x256xf32> -> vector<1x8x256xf32>
    "tpu.trace_stop"() : () -> ()
    %20 = vector.broadcast %7 : vector<1x8x1xf32> to vector<1x8x256xf32>
    %21 = arith.addf %19, %20 : vector<1x8x256xf32>
    %cst_16 = arith.constant 0.000000e+00 : f32
    %22 = vector.broadcast %cst_16 : f32 to vector<1x8x256xf32>
    %23 = arith.maximumf %21, %22 : vector<1x8x256xf32>
    %24 = vector.shape_cast %23 : vector<1x8x256xf32> to vector<8x256xf32>
    %c68_i32 = arith.constant 68 : i32
    %25 = tpu.dynamic_rotate %24 by %c68_i32 dim 1 : vector<8x256xf32>, i32 -> vector<8x256xf32>
    %c0_17 = arith.constant 0 : index
    %c0_18 = arith.constant 0 : index
    %c0_19 = arith.constant 0 : index
    %26 = vector.load %arg10[%c0_17, %c0_18, %c0_19] : memref<9x8x256xf32, #tpu.memory_space<vmem>>, vector<1x8x256xf32>
    %27 = vector.shape_cast %26 : vector<1x8x256xf32> to vector<8x256xf32>
    %28 = arith.mulf %25, %27 : vector<8x256xf32>
    %29 = vector.shape_cast %28 : vector<8x256xf32> to vector<1x8x256xf32>
    %c0_20 = arith.constant 0 : index
    %c0_21 = arith.constant 0 : index
    %c0_22 = arith.constant 0 : index
    %30 = vector.load %arg12[%c0_20, %c0_21, %c0_22] : memref<1x72x256xf32, #tpu.memory_space<vmem>>, vector<1x8x256xf32>
    tpu.vector_store %arg12[%c0_20, %c0_21, %c0_22], %29 {strides = array<i32>} : memref<1x72x256xf32, #tpu.memory_space<vmem>>, vector<1x8x256xf32>,
    %c64_i32 = arith.constant 64 : i32
    %31 = tpu.dynamic_rotate %24 by %c64_i32 dim 1 : vector<8x256xf32>, i32 -> vector<8x256xf32>
    %c1 = arith.constant 1 : index
    %c0_23 = arith.constant 0 : index
    %c0_24 = arith.constant 0 : index
    %32 = vector.load %arg10[%c1, %c0_23, %c0_24] : memref<9x8x256xf32, #tpu.memory_space<vmem>>, vector<1x8x256xf32>
    %33 = vector.shape_cast %32 : vector<1x8x256xf32> to vector<8x256xf32>
    %34 = arith.mulf %31, %33 : vector<8x256xf32>
    %35 = vector.shape_cast %34 : vector<8x256xf32> to vector<1x8x256xf32>
    %c0_25 = arith.constant 0 : index
    %c8 = arith.constant 8 : index
    %c0_26 = arith.constant 0 : index
    %36 = vector.load %arg12[%c0_25, %c8, %c0_26] : memref<1x72x256xf32, #tpu.memory_space<vmem>>, vector<1x8x256xf32>
    tpu.vector_store %arg12[%c0_25, %c8, %c0_26], %35 {strides = array<i32>} : memref<1x72x256xf32, #tpu.memory_space<vmem>>, vector<1x8x256xf32>,
    %c60_i32 = arith.constant 60 : i32
    %37 = tpu.dynamic_rotate %24 by %c60_i32 dim 1 : vector<8x256xf32>, i32 -> vector<8x256xf32>
    %c2 = arith.constant 2 : index
    %c0_27 = arith.constant 0 : index
    %c0_28 = arith.constant 0 : index
    %38 = vector.load %arg10[%c2, %c0_27, %c0_28] : memref<9x8x256xf32, #tpu.memory_space<vmem>>, vector<1x8x256xf32>
    %39 = vector.shape_cast %38 : vector<1x8x256xf32> to vector<8x256xf32>
    %40 = arith.mulf %37, %39 : vector<8x256xf32>
    %41 = vector.shape_cast %40 : vector<8x256xf32> to vector<1x8x256xf32>
    %c0_29 = arith.constant 0 : index
    %c16 = arith.constant 16 : index
    %c0_30 = arith.constant 0 : index
    %42 = vector.load %arg12[%c0_29, %c16, %c0_30] : memref<1x72x256xf32, #tpu.memory_space<vmem>>, vector<1x8x256xf32>
    tpu.vector_store %arg12[%c0_29, %c16, %c0_30], %41 {strides = array<i32>} : memref<1x72x256xf32, #tpu.memory_space<vmem>>, vector<1x8x256xf32>,
    %c4_i32 = arith.constant 4 : i32
    %43 = tpu.dynamic_rotate %24 by %c4_i32 dim 1 : vector<8x256xf32>, i32 -> vector<8x256xf32>
    %c3 = arith.constant 3 : index
    %c0_31 = arith.constant 0 : index
    %c0_32 = arith.constant 0 : index
    %44 = vector.load %arg10[%c3, %c0_31, %c0_32] : memref<9x8x256xf32, #tpu.memory_space<vmem>>, vector<1x8x256xf32>
    %45 = vector.shape_cast %44 : vector<1x8x256xf32> to vector<8x256xf32>
    %46 = arith.mulf %43, %45 : vector<8x256xf32>
    %47 = vector.shape_cast %46 : vector<8x256xf32> to vector<1x8x256xf32>
    %c0_33 = arith.constant 0 : index
    %c24 = arith.constant 24 : index
    %c0_34 = arith.constant 0 : index
    %48 = vector.load %arg12[%c0_33, %c24, %c0_34] : memref<1x72x256xf32, #tpu.memory_space<vmem>>, vector<1x8x256xf32>
    tpu.vector_store %arg12[%c0_33, %c24, %c0_34], %47 {strides = array<i32>} : memref<1x72x256xf32, #tpu.memory_space<vmem>>, vector<1x8x256xf32>,
    %49 = vector.shape_cast %24 : vector<8x256xf32> to vector<1x8x256xf32>
    %c0_35 = arith.constant 0 : index
    %c32 = arith.constant 32 : index
    %c0_36 = arith.constant 0 : index
    %50 = vector.load %arg12[%c0_35, %c32, %c0_36] : memref<1x72x256xf32, #tpu.memory_space<vmem>>, vector<1x8x256xf32>
    tpu.vector_store %arg12[%c0_35, %c32, %c0_36], %49 {strides = array<i32>} : memref<1x72x256xf32, #tpu.memory_space<vmem>>, vector<1x8x256xf32>,
    %c252_i32 = arith.constant 252 : i32
    %51 = tpu.dynamic_rotate %24 by %c252_i32 dim 1 : vector<8x256xf32>, i32 -> vector<8x256xf32>
    %c5 = arith.constant 5 : index
    %c0_37 = arith.constant 0 : index
    %c0_38 = arith.constant 0 : index
    %52 = vector.load %arg10[%c5, %c0_37, %c0_38] : memref<9x8x256xf32, #tpu.memory_space<vmem>>, vector<1x8x256xf32>
    %53 = vector.shape_cast %52 : vector<1x8x256xf32> to vector<8x256xf32>
    %54 = arith.mulf %51, %53 : vector<8x256xf32>
    %55 = vector.shape_cast %54 : vector<8x256xf32> to vector<1x8x256xf32>
    %c0_39 = arith.constant 0 : index
    %c40 = arith.constant 40 : index
    %c0_40 = arith.constant 0 : index
    %56 = vector.load %arg12[%c0_39, %c40, %c0_40] : memref<1x72x256xf32, #tpu.memory_space<vmem>>, vector<1x8x256xf32>
    tpu.vector_store %arg12[%c0_39, %c40, %c0_40], %55 {strides = array<i32>} : memref<1x72x256xf32, #tpu.memory_space<vmem>>, vector<1x8x256xf32>,
    %c196_i32 = arith.constant 196 : i32
    %57 = tpu.dynamic_rotate %24 by %c196_i32 dim 1 : vector<8x256xf32>, i32 -> vector<8x256xf32>
    %c6 = arith.constant 6 : index
    %c0_41 = arith.constant 0 : index
    %c0_42 = arith.constant 0 : index
    %58 = vector.load %arg10[%c6, %c0_41, %c0_42] : memref<9x8x256xf32, #tpu.memory_space<vmem>>, vector<1x8x256xf32>
    %59 = vector.shape_cast %58 : vector<1x8x256xf32> to vector<8x256xf32>
    %60 = arith.mulf %57, %59 : vector<8x256xf32>
    %61 = vector.shape_cast %60 : vector<8x256xf32> to vector<1x8x256xf32>
    %c0_43 = arith.constant 0 : index
    %c48 = arith.constant 48 : index
    %c0_44 = arith.constant 0 : index
    %62 = vector.load %arg12[%c0_43, %c48, %c0_44] : memref<1x72x256xf32, #tpu.memory_space<vmem>>, vector<1x8x256xf32>
    tpu.vector_store %arg12[%c0_43, %c48, %c0_44], %61 {strides = array<i32>} : memref<1x72x256xf32, #tpu.memory_space<vmem>>, vector<1x8x256xf32>,
    %c192_i32 = arith.constant 192 : i32
    %63 = tpu.dynamic_rotate %24 by %c192_i32 dim 1 : vector<8x256xf32>, i32 -> vector<8x256xf32>
    %c7 = arith.constant 7 : index
    %c0_45 = arith.constant 0 : index
    %c0_46 = arith.constant 0 : index
    %64 = vector.load %arg10[%c7, %c0_45, %c0_46] : memref<9x8x256xf32, #tpu.memory_space<vmem>>, vector<1x8x256xf32>
    %65 = vector.shape_cast %64 : vector<1x8x256xf32> to vector<8x256xf32>
    %66 = arith.mulf %63, %65 : vector<8x256xf32>
    %67 = vector.shape_cast %66 : vector<8x256xf32> to vector<1x8x256xf32>
    %c0_47 = arith.constant 0 : index
    %c56 = arith.constant 56 : index
    %c0_48 = arith.constant 0 : index
    %68 = vector.load %arg12[%c0_47, %c56, %c0_48] : memref<1x72x256xf32, #tpu.memory_space<vmem>>, vector<1x8x256xf32>
    tpu.vector_store %arg12[%c0_47, %c56, %c0_48], %67 {strides = array<i32>} : memref<1x72x256xf32, #tpu.memory_space<vmem>>, vector<1x8x256xf32>,
    %c188_i32 = arith.constant 188 : i32
    %69 = tpu.dynamic_rotate %24 by %c188_i32 dim 1 : vector<8x256xf32>, i32 -> vector<8x256xf32>
    %c8_49 = arith.constant 8 : index
    %c0_50 = arith.constant 0 : index
    %c0_51 = arith.constant 0 : index
    %70 = vector.load %arg10[%c8_49, %c0_50, %c0_51] : memref<9x8x256xf32, #tpu.memory_space<vmem>>, vector<1x8x256xf32>
    %71 = vector.shape_cast %70 : vector<1x8x256xf32> to vector<8x256xf32>
    %72 = arith.mulf %69, %71 : vector<8x256xf32>
    %73 = vector.shape_cast %72 : vector<8x256xf32> to vector<1x8x256xf32>
    %c0_52 = arith.constant 0 : index
    %c64 = arith.constant 64 : index
    %c0_53 = arith.constant 0 : index
    %74 = vector.load %arg12[%c0_52, %c64, %c0_53] : memref<1x72x256xf32, #tpu.memory_space<vmem>>, vector<1x8x256xf32>
    tpu.vector_store %arg12[%c0_52, %c64, %c0_53], %73 {strides = array<i32>} : memref<1x72x256xf32, #tpu.memory_space<vmem>>, vector<1x8x256xf32>,
    %c0_54 = arith.constant 0 : index
    %c0_55 = arith.constant 0 : index
    %c0_56 = arith.constant 0 : index
    %75 = vector.load %arg12[%c0_54, %c0_55, %c0_56] : memref<1x72x256xf32, #tpu.memory_space<vmem>>, vector<1x72x256xf32>
    "tpu.trace_start"() <{level = 10 : i32, message = "tok,tkp->top"}> : () -> ()
    %cst_57 = arith.constant dense<0.000000e+00> : vector<1x8x256xf32>
    %76 = tpu.matmul %3, %75, %cst_57 {dimension_numbers = #tpu.dot_dimension_numbers<[2], [1], [1], [2], [0, 0, 0, 1, 1, 2], [0], [0]>} : vector<1x8x72xf32>, vector<1x72x256xf32>, vector<1x8x256xf32> -> vector<1x8x256xf32>
    "tpu.trace_stop"() : () -> ()
    %77 = vector.broadcast %9 : vector<1x8x1xf32> to vector<1x8x256xf32>
    %78 = arith.addf %76, %77 : vector<1x8x256xf32>
    %cst_58 = arith.constant 0.000000e+00 : f32
    %79 = vector.broadcast %cst_58 : f32 to vector<1x8x256xf32>
    %80 = arith.maximumf %78, %79 : vector<1x8x256xf32>
    %81 = vector.shape_cast %80 : vector<1x8x256xf32> to vector<8x256xf32>
    %c68_i32_59 = arith.constant 68 : i32
    %82 = tpu.dynamic_rotate %81 by %c68_i32_59 dim 1 : vector<8x256xf32>, i32 -> vector<8x256xf32>
    %c0_60 = arith.constant 0 : index
    %c0_61 = arith.constant 0 : index
    %c0_62 = arith.constant 0 : index
    %83 = vector.load %arg10[%c0_60, %c0_61, %c0_62] : memref<9x8x256xf32, #tpu.memory_space<vmem>>, vector<1x8x256xf32>
    %84 = vector.shape_cast %83 : vector<1x8x256xf32> to vector<8x256xf32>
    %85 = arith.mulf %82, %84 : vector<8x256xf32>
    %86 = vector.shape_cast %85 : vector<8x256xf32> to vector<1x8x256xf32>
    %c0_63 = arith.constant 0 : index
    %c0_64 = arith.constant 0 : index
    %c0_65 = arith.constant 0 : index
    %87 = vector.load %arg12[%c0_63, %c0_64, %c0_65] : memref<1x72x256xf32, #tpu.memory_space<vmem>>, vector<1x8x256xf32>
    tpu.vector_store %arg12[%c0_63, %c0_64, %c0_65], %86 {strides = array<i32>} : memref<1x72x256xf32, #tpu.memory_space<vmem>>, vector<1x8x256xf32>,
    %c64_i32_66 = arith.constant 64 : i32
    %88 = tpu.dynamic_rotate %81 by %c64_i32_66 dim 1 : vector<8x256xf32>, i32 -> vector<8x256xf32>
    %c1_67 = arith.constant 1 : index
    %c0_68 = arith.constant 0 : index
    %c0_69 = arith.constant 0 : index
    %89 = vector.load %arg10[%c1_67, %c0_68, %c0_69] : memref<9x8x256xf32, #tpu.memory_space<vmem>>, vector<1x8x256xf32>
    %90 = vector.shape_cast %89 : vector<1x8x256xf32> to vector<8x256xf32>
    %91 = arith.mulf %88, %90 : vector<8x256xf32>
    %92 = vector.shape_cast %91 : vector<8x256xf32> to vector<1x8x256xf32>
    %c0_70 = arith.constant 0 : index
    %c8_71 = arith.constant 8 : index
    %c0_72 = arith.constant 0 : index
    %93 = vector.load %arg12[%c0_70, %c8_71, %c0_72] : memref<1x72x256xf32, #tpu.memory_space<vmem>>, vector<1x8x256xf32>
    tpu.vector_store %arg12[%c0_70, %c8_71, %c0_72], %92 {strides = array<i32>} : memref<1x72x256xf32, #tpu.memory_space<vmem>>, vector<1x8x256xf32>,
    %c60_i32_73 = arith.constant 60 : i32
    %94 = tpu.dynamic_rotate %81 by %c60_i32_73 dim 1 : vector<8x256xf32>, i32 -> vector<8x256xf32>
    %c2_74 = arith.constant 2 : index
    %c0_75 = arith.constant 0 : index
    %c0_76 = arith.constant 0 : index
    %95 = vector.load %arg10[%c2_74, %c0_75, %c0_76] : memref<9x8x256xf32, #tpu.memory_space<vmem>>, vector<1x8x256xf32>
    %96 = vector.shape_cast %95 : vector<1x8x256xf32> to vector<8x256xf32>
    %97 = arith.mulf %94, %96 : vector<8x256xf32>
    %98 = vector.shape_cast %97 : vector<8x256xf32> to vector<1x8x256xf32>
    %c0_77 = arith.constant 0 : index
    %c16_78 = arith.constant 16 : index
    %c0_79 = arith.constant 0 : index
    %99 = vector.load %arg12[%c0_77, %c16_78, %c0_79] : memref<1x72x256xf32, #tpu.memory_space<vmem>>, vector<1x8x256xf32>
    tpu.vector_store %arg12[%c0_77, %c16_78, %c0_79], %98 {strides = array<i32>} : memref<1x72x256xf32, #tpu.memory_space<vmem>>, vector<1x8x256xf32>,
    %c4_i32_80 = arith.constant 4 : i32
    %100 = tpu.dynamic_rotate %81 by %c4_i32_80 dim 1 : vector<8x256xf32>, i32 -> vector<8x256xf32>
    %c3_81 = arith.constant 3 : index
    %c0_82 = arith.constant 0 : index
    %c0_83 = arith.constant 0 : index
    %101 = vector.load %arg10[%c3_81, %c0_82, %c0_83] : memref<9x8x256xf32, #tpu.memory_space<vmem>>, vector<1x8x256xf32>
    %102 = vector.shape_cast %101 : vector<1x8x256xf32> to vector<8x256xf32>
    %103 = arith.mulf %100, %102 : vector<8x256xf32>
    %104 = vector.shape_cast %103 : vector<8x256xf32> to vector<1x8x256xf32>
    %c0_84 = arith.constant 0 : index
    %c24_85 = arith.constant 24 : index
    %c0_86 = arith.constant 0 : index
    %105 = vector.load %arg12[%c0_84, %c24_85, %c0_86] : memref<1x72x256xf32, #tpu.memory_space<vmem>>, vector<1x8x256xf32>
    tpu.vector_store %arg12[%c0_84, %c24_85, %c0_86], %104 {strides = array<i32>} : memref<1x72x256xf32, #tpu.memory_space<vmem>>, vector<1x8x256xf32>,
    %106 = vector.shape_cast %81 : vector<8x256xf32> to vector<1x8x256xf32>
    %c0_87 = arith.constant 0 : index
    %c32_88 = arith.constant 32 : index
    %c0_89 = arith.constant 0 : index
    %107 = vector.load %arg12[%c0_87, %c32_88, %c0_89] : memref<1x72x256xf32, #tpu.memory_space<vmem>>, vector<1x8x256xf32>
    tpu.vector_store %arg12[%c0_87, %c32_88, %c0_89], %106 {strides = array<i32>} : memref<1x72x256xf32, #tpu.memory_space<vmem>>, vector<1x8x256xf32>,
    %c252_i32_90 = arith.constant 252 : i32
    %108 = tpu.dynamic_rotate %81 by %c252_i32_90 dim 1 : vector<8x256xf32>, i32 -> vector<8x256xf32>
    %c5_91 = arith.constant 5 : index
    %c0_92 = arith.constant 0 : index
    %c0_93 = arith.constant 0 : index
    %109 = vector.load %arg10[%c5_91, %c0_92, %c0_93] : memref<9x8x256xf32, #tpu.memory_space<vmem>>, vector<1x8x256xf32>
    %110 = vector.shape_cast %109 : vector<1x8x256xf32> to vector<8x256xf32>
    %111 = arith.mulf %108, %110 : vector<8x256xf32>
    %112 = vector.shape_cast %111 : vector<8x256xf32> to vector<1x8x256xf32>
    %c0_94 = arith.constant 0 : index
    %c40_95 = arith.constant 40 : index
    %c0_96 = arith.constant 0 : index
    %113 = vector.load %arg12[%c0_94, %c40_95, %c0_96] : memref<1x72x256xf32, #tpu.memory_space<vmem>>, vector<1x8x256xf32>
    tpu.vector_store %arg12[%c0_94, %c40_95, %c0_96], %112 {strides = array<i32>} : memref<1x72x256xf32, #tpu.memory_space<vmem>>, vector<1x8x256xf32>,
    %c196_i32_97 = arith.constant 196 : i32
    %114 = tpu.dynamic_rotate %81 by %c196_i32_97 dim 1 : vector<8x256xf32>, i32 -> vector<8x256xf32>
    %c6_98 = arith.constant 6 : index
    %c0_99 = arith.constant 0 : index
    %c0_100 = arith.constant 0 : index
    %115 = vector.load %arg10[%c6_98, %c0_99, %c0_100] : memref<9x8x256xf32, #tpu.memory_space<vmem>>, vector<1x8x256xf32>
    %116 = vector.shape_cast %115 : vector<1x8x256xf32> to vector<8x256xf32>
    %117 = arith.mulf %114, %116 : vector<8x256xf32>
    %118 = vector.shape_cast %117 : vector<8x256xf32> to vector<1x8x256xf32>
    %c0_101 = arith.constant 0 : index
    %c48_102 = arith.constant 48 : index
    %c0_103 = arith.constant 0 : index
    %119 = vector.load %arg12[%c0_101, %c48_102, %c0_103] : memref<1x72x256xf32, #tpu.memory_space<vmem>>, vector<1x8x256xf32>
    tpu.vector_store %arg12[%c0_101, %c48_102, %c0_103], %118 {strides = array<i32>} : memref<1x72x256xf32, #tpu.memory_space<vmem>>, vector<1x8x256xf32>,
    %c192_i32_104 = arith.constant 192 : i32
    %120 = tpu.dynamic_rotate %81 by %c192_i32_104 dim 1 : vector<8x256xf32>, i32 -> vector<8x256xf32>
    %c7_105 = arith.constant 7 : index
    %c0_106 = arith.constant 0 : index
    %c0_107 = arith.constant 0 : index
    %121 = vector.load %arg10[%c7_105, %c0_106, %c0_107] : memref<9x8x256xf32, #tpu.memory_space<vmem>>, vector<1x8x256xf32>
    %122 = vector.shape_cast %121 : vector<1x8x256xf32> to vector<8x256xf32>
    %123 = arith.mulf %120, %122 : vector<8x256xf32>
    %124 = vector.shape_cast %123 : vector<8x256xf32> to vector<1x8x256xf32>
    %c0_108 = arith.constant 0 : index
    %c56_109 = arith.constant 56 : index
    %c0_110 = arith.constant 0 : index
    %125 = vector.load %arg12[%c0_108, %c56_109, %c0_110] : memref<1x72x256xf32, #tpu.memory_space<vmem>>, vector<1x8x256xf32>
    tpu.vector_store %arg12[%c0_108, %c56_109, %c0_110], %124 {strides = array<i32>} : memref<1x72x256xf32, #tpu.memory_space<vmem>>, vector<1x8x256xf32>,
    %c188_i32_111 = arith.constant 188 : i32
    %126 = tpu.dynamic_rotate %81 by %c188_i32_111 dim 1 : vector<8x256xf32>, i32 -> vector<8x256xf32>
    %c8_112 = arith.constant 8 : index
    %c0_113 = arith.constant 0 : index
    %c0_114 = arith.constant 0 : index
    %127 = vector.load %arg10[%c8_112, %c0_113, %c0_114] : memref<9x8x256xf32, #tpu.memory_space<vmem>>, vector<1x8x256xf32>
    %128 = vector.shape_cast %127 : vector<1x8x256xf32> to vector<8x256xf32>
    %129 = arith.mulf %126, %128 : vector<8x256xf32>
    %130 = vector.shape_cast %129 : vector<8x256xf32> to vector<1x8x256xf32>
    %c0_115 = arith.constant 0 : index
    %c64_116 = arith.constant 64 : index
    %c0_117 = arith.constant 0 : index
    %131 = vector.load %arg12[%c0_115, %c64_116, %c0_117] : memref<1x72x256xf32, #tpu.memory_space<vmem>>, vector<1x8x256xf32>
    tpu.vector_store %arg12[%c0_115, %c64_116, %c0_117], %130 {strides = array<i32>} : memref<1x72x256xf32, #tpu.memory_space<vmem>>, vector<1x8x256xf32>,
    %c0_118 = arith.constant 0 : index
    %c0_119 = arith.constant 0 : index
    %c0_120 = arith.constant 0 : index
    %132 = vector.load %arg12[%c0_118, %c0_119, %c0_120] : memref<1x72x256xf32, #tpu.memory_space<vmem>>, vector<1x72x256xf32>
    "tpu.trace_start"() <{level = 10 : i32, message = "tok,tkp->top"}> : () -> ()
    %cst_121 = arith.constant dense<0.000000e+00> : vector<1x8x256xf32>
    %133 = tpu.matmul %5, %132, %cst_121 {dimension_numbers = #tpu.dot_dimension_numbers<[2], [1], [1], [2], [0, 0, 0, 1, 1, 2], [0], [0]>} : vector<1x8x72xf32>, vector<1x72x256xf32>, vector<1x8x256xf32> -> vector<1x8x256xf32>
    "tpu.trace_stop"() : () -> ()
    %134 = vector.broadcast %11 : vector<1x8x1xf32> to vector<1x8x256xf32>
    %135 = arith.addf %133, %134 : vector<1x8x256xf32>
    %cst_122 = arith.constant 0.000000e+00 : f32
    %136 = vector.broadcast %cst_122 : f32 to vector<1x8x256xf32>
    %137 = arith.maximumf %135, %136 : vector<1x8x256xf32>
    %138 = vector.broadcast %13 : vector<1x8x1xf32> to vector<1x8x256xf32>
    %139 = arith.mulf %137, %138 : vector<1x8x256xf32>
    %cst_123 = arith.constant dense<0.000000e+00> : vector<1x256xf32>
    %140 = vector.multi_reduction <add>, %139, %cst_123 [1] : vector<1x8x256xf32> to vector<1x256xf32>
    %141 = vector.shape_cast %140 : vector<1x256xf32> to vector<1x1x256xf32>
    %142 = vector.broadcast %14 : f32 to vector<1x1x256xf32>
    %143 = arith.addf %141, %142 : vector<1x1x256xf32>
    %144 = arith.negf %143 : vector<1x1x256xf32>
    %145 = math.exp %144 : vector<1x1x256xf32>
    %cst_124 = arith.constant 1.000000e+00 : f32
    %146 = vector.broadcast %cst_124 : f32 to vector<1x1x256xf32>
    %147 = arith.addf %146, %145 : vector<1x1x256xf32>
    %148 = arith.divf %146, %147 : vector<1x1x256xf32>
    %cst_125 = arith.constant 1.000000e+00 : f32
    %149 = vector.broadcast %cst_125 : f32 to vector<1x1x256xf32>
    %150 = arith.addf %149, %148 : vector<1x1x256xf32>
    %151 = vector.broadcast %150 : vector<1x1x256xf32> to vector<1x32x256xf32>
    %152 = arith.mulf %151, %18 : vector<1x32x256xf32>
    %153 = arith.index_cast %16 : i32 to index
    %c0_126 = arith.constant 0 : index
    %c0_127 = arith.constant 0 : index
    %154 = vector.load %arg11[%153, %c0_126, %c0_127] : memref<1x32x256xf32, #tpu.memory_space<vmem>>, vector<1x32x256xf32>
    tpu.vector_store %arg11[%153, %c0_126, %c0_127], %152 {strides = array<i32>} : memref<1x32x256xf32, #tpu.memory_space<vmem>>, vector<1x32x256xf32>,
    %c1_i32_128 = arith.constant 1 : i32
    return
  }
  func.func @transform_0(%arg0: i32) -> (i32, i32, i32) {
    %c0_i32 = arith.constant 0 : i32
    %c0_i32_0 = arith.constant 0 : i32
    %c0_i32_1 = arith.constant 0 : i32
    return %arg0, %c0_i32, %c0_i32_0 : i32, i32, i32
  }
  func.func @transform_1(%arg0: i32) -> (i32, i32) {
    %c0_i32 = arith.constant 0 : i32
    %c0_i32_0 = arith.constant 0 : i32
    %c0_i32_1 = arith.constant 0 : i32
    return %c0_i32, %c0_i32_0 : i32, i32
  }
  func.func @transform_2(%arg0: i32) -> (i32, i32) {
    %c0_i32 = arith.constant 0 : i32
    %c0_i32_0 = arith.constant 0 : i32
    %c0_i32_1 = arith.constant 0 : i32
    return %c0_i32, %c0_i32_0 : i32, i32
  }
  func.func @transform_3(%arg0: i32) -> (i32, i32) {
    %c0_i32 = arith.constant 0 : i32
    %c0_i32_0 = arith.constant 0 : i32
    %c0_i32_1 = arith.constant 0 : i32
    return %c0_i32, %c0_i32_0 : i32, i32
  }
  func.func @transform_4(%arg0: i32) -> (i32, i32) {
    %c0_i32 = arith.constant 0 : i32
    %c0_i32_0 = arith.constant 0 : i32
    %c0_i32_1 = arith.constant 0 : i32
    return %c0_i32, %c0_i32_0 : i32, i32
  }
  func.func @transform_5(%arg0: i32) -> (i32, i32) {
    %c0_i32 = arith.constant 0 : i32
    %c0_i32_0 = arith.constant 0 : i32
    %c0_i32_1 = arith.constant 0 : i32
    return %c0_i32, %c0_i32_0 : i32, i32
  }
  func.func @transform_6(%arg0: i32) -> (i32, i32) {
    %c0_i32 = arith.constant 0 : i32
    %c0_i32_0 = arith.constant 0 : i32
    %c0_i32_1 = arith.constant 0 : i32
    return %c0_i32, %c0_i32_0 : i32, i32
  }
  func.func @transform_7(%arg0: i32) -> (i32, i32) {
    %c0_i32 = arith.constant 0 : i32
    %c0_i32_0 = arith.constant 0 : i32
    %c0_i32_1 = arith.constant 0 : i32
    return %c0_i32, %c0_i32_0 : i32, i32
  }
  func.func @transform_8(%arg0: i32) -> i32 {
    %c0_i32 = arith.constant 0 : i32
    %c0_i32_0 = arith.constant 0 : i32
    return %c0_i32 : i32
  }
  func.func @transform_9(%arg0: i32) -> (i32, i32, i32) {
    %c0_i32 = arith.constant 0 : i32
    %c0_i32_0 = arith.constant 0 : i32
    %c0_i32_1 = arith.constant 0 : i32
    %c0_i32_2 = arith.constant 0 : i32
    return %c0_i32, %c0_i32_0, %c0_i32_1 : i32, i32, i32
  }
  func.func @transform_10(%arg0: i32) -> (i32, i32, i32) {
    %c0_i32 = arith.constant 0 : i32
    %c0_i32_0 = arith.constant 0 : i32
    %c0_i32_1 = arith.constant 0 : i32
    return %arg0, %c0_i32, %c0_i32_0 : i32, i32, i32
  }
}

</mosaic_0001>

<llo_original>
// kernel: tpu_custom_call.1
$region0: #{tpu_custom_call.1}
  #allocation0 [shape = 'u32[]', space=smem, size = 0x4, offset = 0x4, fixed_abs, tag = 'smem constant byte address 0x4 - core index']
  #allocation1 [shape = 'u32[144,128]{1,0:T(1,128)}', space=vmem, size = 0x12000, scoped, tag = 'internal scratch']
  #allocation2 [shape = 'f32[1,72,256]{2,1,0:T(8,128)}', space=vmem, size = 0x12000, scoped, tag = 'scratch operand']
  #allocation3 [shape = 'f32[1]{0:T(128)S(6)}', space=smem, size = 0x200, scoped, tag = 'scoped memory for tpu_custom_call.1']
  %s0 = inlined_call_operand.hbm [shape: f32[2,32,256], index: 0, kind: input, shape index: {}]
  %s1 = inlined_call_operand.vmem [shape: f32[8,32], index: 1, kind: input, shape index: {}]
  %s2 = inlined_call_operand.vmem [shape: f32[8,1], index: 2, kind: input, shape index: {}]
  %s3 = inlined_call_operand.vmem [shape: f32[8,72], index: 3, kind: input, shape index: {}]
  %s4 = inlined_call_operand.vmem [shape: f32[8,1], index: 4, kind: input, shape index: {}]
  %s5 = inlined_call_operand.vmem [shape: f32[8,72], index: 5, kind: input, shape index: {}]
  %s6 = inlined_call_operand.vmem [shape: f32[8,1], index: 6, kind: input, shape index: {}]
  %s7 = inlined_call_operand.vmem [shape: f32[8,1], index: 7, kind: input, shape index: {}]
  %s8 = inlined_call_operand.<no memory space> [shape: f32[1], index: 8, kind: input, shape index: {}]
  %s9 = inlined_call_operand.hbm [shape: f32[9,8,256], index: 9, kind: input, shape index: {}]
  %s10 = inlined_call_operand.hbm [shape: f32[2,32,256], index: 10, kind: output, shape index: {}]
  %s11 = sld [smem:[#allocation0]]
  $region81: #{tpu_custom_call.1} parent=0
    _
  %s13 = ssub.s32 1, %s11
  %s14 = scalar_select 0, %s13, %s11
  %15 = sst [smem:[#allocation3]] %s8
  $region1: #{tpu_custom_call.1} parent=0
    #allocation4 [shape = 'u8[65536]{0}', space=vmem, size = 0x10000, scoped, tag = 'input window, operand 0']
    #allocation5 [shape = 's32[2]{0}', space=sflag, size = 0x8, scoped, tag = 'scoped memory for tpu_custom_call.1']
    #allocation6 [shape = 's32[2]{0}', space=sflag, size = 0x8, scoped, tag = 'scoped memory for tpu_custom_call.1']
    #allocation7 [shape = 'u8[73728]{0}', space=vmem, size = 0x12000, scoped, tag = 'input window, operand 9, single buffered']
    #allocation8 [shape = 's32[1]{0}', space=sflag, size = 0x4, scoped, tag = 'scoped memory for tpu_custom_call.1']
    #allocation9 [shape = 'u8[65536]{0}', space=vmem, size = 0x10000, scoped, tag = 'output window, operand 0']
    %16 = vsyncpa [#allocation5], 0
    %s17 = scalar_lea.sflag [#allocation5], 1
    %18 = vsyncpa %s17, 0
    %19 = vsyncpa [#allocation8], 0
    %20 = vsyncpa [#allocation6], 0
    %s21 = scalar_lea.sflag [#allocation6], 1
    %22 = vsyncpa %s21, 0
    loop: start=0, step=1, limit=4
    $region2: #{tpu_custom_call.1} parent=1 // loop_pre_header
      _
    $region3: #{tpu_custom_call.1} parent=1 // loop_header
      %s24 = sphi 0, %s28
      %p25 = scmp.ge.s32.totalorder %s24, 4
      %s34 = sphi 0, %s36
      %s37 = sphi 0, %s34
      %s38 = sphi 0, %s37
      %s54 = sphi 0, %s38
      %s58 = sphi 0, %s58
      %s60 = sphi 0, %s58
      %s61 = sphi 0, %s60
      %s75 = sphi 0, %s61
      %s79 = sphi 0, %s79
      %s81 = sphi 0, %s79
      %s82 = sphi 0, %s81
      %s96 = sphi 0, %s82
      %s100 = sphi 0, %s100
      %s102 = sphi 0, %s100
      %s103 = sphi 0, %s102
      %s117 = sphi 0, %s103
      %s121 = sphi 0, %s121
      %s123 = sphi 0, %s121
      %s124 = sphi 0, %s123
      %s138 = sphi 0, %s124
      %s142 = sphi 0, %s142
      %s144 = sphi 0, %s142
      %s145 = sphi 0, %s144
      %s159 = sphi 0, %s145
      %s163 = sphi 0, %s163
      %s165 = sphi 0, %s163
      %s166 = sphi 0, %s165
      %s180 = sphi 0, %s166
      %s184 = sphi 0, %s184
      %s186 = sphi 0, %s184
      %s187 = sphi 0, %s186
      %s201 = sphi 0, %s187
      %s205 = sphi 0, %s205
      %s207 = sphi 0, %s205
      %s208 = sphi 0, %s207
      %s222 = sphi 0, %s208
      %s226 = sphi 0, %s226
      %s228 = sphi 0, %s226
      %s229 = sphi 0, %s228
      %s243 = sphi 0, %s229
      %s249 = sphi 0, %s251
      %s252 = sphi 0, %s249
      %s253 = sphi 0, %s252
      %s269 = sphi 0, %s253
    $region4: #{tpu_custom_call.1} parent=1 // loop_header_branch
      %27 = sbr.rel (%p25) target = $region8
    $region5: #{tpu_custom_call.1} parent=1 // loop_body
      %s29 = ssub.s32 %s24, 1
      %s30 = ssub.s32 %s24, 2
      %s31 = sadd.s32 %s24, 1
      %s32 = ssub.s32 %s24, %s31
      %p33 = scmp.eq.s32.totalorder %s32, 0
      %s35 = sadd.s32 %s34, 1
      %s36 = scalar_select %p33, %s34, %s35
      %p39 = pneg %p33
      %p40 = scmp.eq.s32.totalorder %s24, 1
      %p41 = por %p39, %p40
      %p42 = scmp.ne.s32.totalorder %s34, %s37
      %p43 = scmp.eq.s32.totalorder %s24, 0
      %p44 = por %p42, %p43
      %p45 = scmp.ne.s32.totalorder %s34, %s37
      %p46 = scmp.eq.s32.totalorder %s29, 1
      %p47 = por %p45, %p46
      %p48 = scmp.ne.s32.totalorder %s37, %s38
      %p49 = scmp.eq.s32.totalorder %s29, 0
      %p50 = por %p48, %p49
      %p51 = scmp.ne.s32.totalorder %s37, %s38
      %p52 = scmp.eq.s32.totalorder %s30, 1
      %p53 = por %p51, %p52
      %p55 = scmp.ne.s32.totalorder %s38, %s54
      %p56 = scmp.eq.s32.totalorder %s30, 0
      %p57 = por %p55, %p56
      %s59 = sadd.s32 %s58, 1
      %p62 = scmp.eq.s32.totalorder %s24, 1
      %p63 = scmp.ne.s32.totalorder %s58, %s60
      %p64 = scmp.eq.s32.totalorder %s24, 0
      %p65 = por %p63, %p64
      %p66 = scmp.ne.s32.totalorder %s58, %s60
      %p67 = scmp.eq.s32.totalorder %s29, 1
      %p68 = por %p66, %p67
      %p69 = scmp.ne.s32.totalorder %s60, %s61
      %p70 = scmp.eq.s32.totalorder %s29, 0
      %p71 = por %p69, %p70
      %p72 = scmp.ne.s32.totalorder %s60, %s61
      %p73 = scmp.eq.s32.totalorder %s30, 1
      %p74 = por %p72, %p73
      %p76 = scmp.ne.s32.totalorder %s61, %s75
      %p77 = scmp.eq.s32.totalorder %s30, 0
      %p78 = por %p76, %p77
      %s80 = sadd.s32 %s79, 1
      %p83 = scmp.eq.s32.totalorder %s24, 1
      %p84 = scmp.ne.s32.totalorder %s79, %s81
      %p85 = scmp.eq.s32.totalorder %s24, 0
      %p86 = por %p84, %p85
      %p87 = scmp.ne.s32.totalorder %s79, %s81
      %p88 = scmp.eq.s32.totalorder %s29, 1
      %p89 = por %p87, %p88
      %p90 = scmp.ne.s32.totalorder %s81, %s82
      %p91 = scmp.eq.s32.totalorder %s29, 0
      %p92 = por %p90, %p91
      %p93 = scmp.ne.s32.totalorder %s81, %s82
      %p94 = scmp.eq.s32.totalorder %s30, 1
      %p95 = por %p93, %p94
      %p97 = scmp.ne.s32.totalorder %s82, %s96
      %p98 = scmp.eq.s32.totalorder %s30, 0
      %p99 = por %p97, %p98
      %s101 = sadd.s32 %s100, 1
      %p104 = scmp.eq.s32.totalorder %s24, 1
      %p105 = scmp.ne.s32.totalorder %s100, %s102
      %p106 = scmp.eq.s32.totalorder %s24, 0
      %p107 = por %p105, %p106
      %p108 = scmp.ne.s32.totalorder %s100, %s102
      %p109 = scmp.eq.s32.totalorder %s29, 1
      %p110 = por %p108, %p109
      %p111 = scmp.ne.s32.totalorder %s102, %s103
      %p112 = scmp.eq.s32.totalorder %s29, 0
      %p113 = por %p111, %p112
      %p114 = scmp.ne.s32.totalorder %s102, %s103
      %p115 = scmp.eq.s32.totalorder %s30, 1
      %p116 = por %p114, %p115
      %p118 = scmp.ne.s32.totalorder %s103, %s117
      %p119 = scmp.eq.s32.totalorder %s30, 0
      %p120 = por %p118, %p119
      %s122 = sadd.s32 %s121, 1
      %p125 = scmp.eq.s32.totalorder %s24, 1
      %p126 = scmp.ne.s32.totalorder %s121, %s123
      %p127 = scmp.eq.s32.totalorder %s24, 0
      %p128 = por %p126, %p127
      %p129 = scmp.ne.s32.totalorder %s121, %s123
      %p130 = scmp.eq.s32.totalorder %s29, 1
      %p131 = por %p129, %p130
      %p132 = scmp.ne.s32.totalorder %s123, %s124
      %p133 = scmp.eq.s32.totalorder %s29, 0
      %p134 = por %p132, %p133
      %p135 = scmp.ne.s32.totalorder %s123, %s124
      %p136 = scmp.eq.s32.totalorder %s30, 1
      %p137 = por %p135, %p136
      %p139 = scmp.ne.s32.totalorder %s124, %s138
      %p140 = scmp.eq.s32.totalorder %s30, 0
      %p141 = por %p139, %p140
      %s143 = sadd.s32 %s142, 1
      %p146 = scmp.eq.s32.totalorder %s24, 1
      %p147 = scmp.ne.s32.totalorder %s142, %s144
      %p148 = scmp.eq.s32.totalorder %s24, 0
      %p149 = por %p147, %p148
      %p150 = scmp.ne.s32.totalorder %s142, %s144
      %p151 = scmp.eq.s32.totalorder %s29, 1
      %p152 = por %p150, %p151
      %p153 = scmp.ne.s32.totalorder %s144, %s145
      %p154 = scmp.eq.s32.totalorder %s29, 0
      %p155 = por %p153, %p154
      %p156 = scmp.ne.s32.totalorder %s144, %s145
      %p157 = scmp.eq.s32.totalorder %s30, 1
      %p158 = por %p156, %p157
      %p160 = scmp.ne.s32.totalorder %s145, %s159
      %p161 = scmp.eq.s32.totalorder %s30, 0
      %p162 = por %p160, %p161
      %s164 = sadd.s32 %s163, 1
      %p167 = scmp.eq.s32.totalorder %s24, 1
      %p168 = scmp.ne.s32.totalorder %s163, %s165
      %p169 = scmp.eq.s32.totalorder %s24, 0
      %p170 = por %p168, %p169
      %p171 = scmp.ne.s32.totalorder %s163, %s165
      %p172 = scmp.eq.s32.totalorder %s29, 1
      %p173 = por %p171, %p172
      %p174 = scmp.ne.s32.totalorder %s165, %s166
      %p175 = scmp.eq.s32.totalorder %s29, 0
      %p176 = por %p174, %p175
      %p177 = scmp.ne.s32.totalorder %s165, %s166
      %p178 = scmp.eq.s32.totalorder %s30, 1
      %p179 = por %p177, %p178
      %p181 = scmp.ne.s32.totalorder %s166, %s180
      %p182 = scmp.eq.s32.totalorder %s30, 0
      %p183 = por %p181, %p182
      %s185 = sadd.s32 %s184, 1
      %p188 = scmp.eq.s32.totalorder %s24, 1
      %p189 = scmp.ne.s32.totalorder %s184, %s186
      %p190 = scmp.eq.s32.totalorder %s24, 0
      %p191 = por %p189, %p190
      %p192 = scmp.ne.s32.totalorder %s184, %s186
      %p193 = scmp.eq.s32.totalorder %s29, 1
      %p194 = por %p192, %p193
      %p195 = scmp.ne.s32.totalorder %s186, %s187
      %p196 = scmp.eq.s32.totalorder %s29, 0
      %p197 = por %p195, %p196
      %p198 = scmp.ne.s32.totalorder %s186, %s187
      %p199 = scmp.eq.s32.totalorder %s30, 1
      %p200 = por %p198, %p199
      %p202 = scmp.ne.s32.totalorder %s187, %s201
      %p203 = scmp.eq.s32.totalorder %s30, 0
      %p204 = por %p202, %p203
      %s206 = sadd.s32 %s205, 1
      %p209 = scmp.eq.s32.totalorder %s24, 1
      %p210 = scmp.ne.s32.totalorder %s205, %s207
      %p211 = scmp.eq.s32.totalorder %s24, 0
      %p212 = por %p210, %p211
      %p213 = scmp.ne.s32.totalorder %s205, %s207
      %p214 = scmp.eq.s32.totalorder %s29, 1
      %p215 = por %p213, %p214
      %p216 = scmp.ne.s32.totalorder %s207, %s208
      %p217 = scmp.eq.s32.totalorder %s29, 0
      %p218 = por %p216, %p217
      %p219 = scmp.ne.s32.totalorder %s207, %s208
      %p220 = scmp.eq.s32.totalorder %s30, 1
      %p221 = por %p219, %p220
      %p223 = scmp.ne.s32.totalorder %s208, %s222
      %p224 = scmp.eq.s32.totalorder %s30, 0
      %p225 = por %p223, %p224
      %s227 = sadd.s32 %s226, 1
      %p230 = scmp.eq.s32.totalorder %s24, 1
      %p231 = scmp.ne.s32.totalorder %s226, %s228
      %p232 = scmp.eq.s32.totalorder %s24, 0
      %p233 = por %p231, %p232
      %p234 = scmp.ne.s32.totalorder %s226, %s228
      %p235 = scmp.eq.s32.totalorder %s29, 1
      %p236 = por %p234, %p235
      %p237 = scmp.ne.s32.totalorder %s228, %s229
      %p238 = scmp.eq.s32.totalorder %s29, 0
      %p239 = por %p237, %p238
      %p240 = scmp.ne.s32.totalorder %s228, %s229
      %p241 = scmp.eq.s32.totalorder %s30, 1
      %p242 = por %p240, %p241
      %p244 = scmp.ne.s32.totalorder %s229, %s243
      %p245 = scmp.eq.s32.totalorder %s30, 0
      %p246 = por %p244, %p245
      %s247 = ssub.s32 %s24, %s31
      %p248 = scmp.eq.s32.totalorder %s247, 0
      %s250 = sadd.s32 %s249, 1
      %s251 = scalar_select %p248, %s249, %s250
      %p254 = pneg %p248
      %p255 = scmp.eq.s32.totalorder %s24, 1
      %p256 = por %p254, %p255
      %p257 = scmp.ne.s32.totalorder %s249, %s252
      %p258 = scmp.eq.s32.totalorder %s24, 0
      %p259 = por %p257, %p258
      %p260 = scmp.ne.s32.totalorder %s249, %s252
      %p261 = scmp.eq.s32.totalorder %s29, 1
      %p262 = por %p260, %p261
      %p263 = scmp.ne.s32.totalorder %s252, %s253
      %p264 = scmp.eq.s32.totalorder %s29, 0
      %p265 = por %p263, %p264
      %p266 = scmp.ne.s32.totalorder %s252, %s253
      %p267 = scmp.eq.s32.totalorder %s30, 1
      %p268 = por %p266, %p267
      %p270 = scmp.ne.s32.totalorder %s253, %s269
      %p271 = scmp.eq.s32.totalorder %s30, 0
      %p272 = por %p270, %p271
      %p273 = scmp.le.s32.totalorder 1, %s24
      %p274 = scmp.lt.s32.totalorder %s24, 3
      %p275 = pnand %p273, %p274
      %p276 = pneg %p275
      // Predicated region
      $region9: #{tpu_custom_call.1} parent=5 // pred_check
        _
      $region10: #{tpu_custom_call.1} parent=5 // pred_check_branch
        %278 = sbr.rel (%p275) target = $region12
      $region11: #{tpu_custom_call.1} parent=5 // pred_region
        %s279 = ssub.s32 %s24, 1
        // Predicated region
        $region13: #{tpu_custom_call.1} parent=11 // pred_check
          %p280 = pneg %p71
        $region14: #{tpu_custom_call.1} parent=11 // pred_check_branch
          %282 = sbr.rel (%p280) target = $region16
        $region15: #{tpu_custom_call.1} parent=11 // pred_region
          _
        $region16: #{tpu_custom_call.1} parent=11 // pred_fallthru
          _
        // Predicated region
        $region17: #{tpu_custom_call.1} parent=11 // pred_check
          %p283 = pneg %p92
        $region18: #{tpu_custom_call.1} parent=11 // pred_check_branch
          %285 = sbr.rel (%p283) target = $region20
        $region19: #{tpu_custom_call.1} parent=11 // pred_region
          _
        $region20: #{tpu_custom_call.1} parent=11 // pred_fallthru
          _
        // Predicated region
        $region21: #{tpu_custom_call.1} parent=11 // pred_check
          %p286 = pneg %p113
        $region22: #{tpu_custom_call.1} parent=11 // pred_check_branch
          %288 = sbr.rel (%p286) target = $region24
        $region23: #{tpu_custom_call.1} parent=11 // pred_region
          _
        $region24: #{tpu_custom_call.1} parent=11 // pred_fallthru
          _
        // Predicated region
        $region25: #{tpu_custom_call.1} parent=11 // pred_check
          %p289 = pneg %p134
        $region26: #{tpu_custom_call.1} parent=11 // pred_check_branch
          %291 = sbr.rel (%p289) target = $region28
        $region27: #{tpu_custom_call.1} parent=11 // pred_region
          _
        $region28: #{tpu_custom_call.1} parent=11 // pred_fallthru
          _
        // Predicated region
        $region29: #{tpu_custom_call.1} parent=11 // pred_check
          %p292 = pneg %p155
        $region30: #{tpu_custom_call.1} parent=11 // pred_check_branch
          %294 = sbr.rel (%p292) target = $region32
        $region31: #{tpu_custom_call.1} parent=11 // pred_region
          _
        $region32: #{tpu_custom_call.1} parent=11 // pred_fallthru
          _
        // Predicated region
        $region33: #{tpu_custom_call.1} parent=11 // pred_check
          %p295 = pneg %p176
        $region34: #{tpu_custom_call.1} parent=11 // pred_check_branch
          %297 = sbr.rel (%p295) target = $region36
        $region35: #{tpu_custom_call.1} parent=11 // pred_region
          _
        $region36: #{tpu_custom_call.1} parent=11 // pred_fallthru
          _
        // Predicated region
        $region37: #{tpu_custom_call.1} parent=11 // pred_check
          %p298 = pneg %p197
        $region38: #{tpu_custom_call.1} parent=11 // pred_check_branch
          %300 = sbr.rel (%p298) target = $region40
        $region39: #{tpu_custom_call.1} parent=11 // pred_region
          _
        $region40: #{tpu_custom_call.1} parent=11 // pred_fallthru
          _
        // Predicated region
        $region41: #{tpu_custom_call.1} parent=11 // pred_check
          %p301 = pneg %p218
        $region42: #{tpu_custom_call.1} parent=11 // pred_check_branch
          %303 = sbr.rel (%p301) target = $region44
        $region43: #{tpu_custom_call.1} parent=11 // pred_region
          _
        $region44: #{tpu_custom_call.1} parent=11 // pred_fallthru
          _
        // Predicated region
        $region45: #{tpu_custom_call.1} parent=11 // pred_check
          %p304 = pneg %p239
        $region46: #{tpu_custom_call.1} parent=11 // pred_check_branch
          %306 = sbr.rel (%p304) target = $region48
        $region47: #{tpu_custom_call.1} parent=11 // pred_region
          %s308 = ssub.s32 2304, 2304
          %309 = vsyncadd [#allocation8], %s308
          %s310 = sshll.u32 [#allocation7], 4
          %s311 = int_to_ptr.vmem [resolvable:$true] %s310
          %316 = dma.hbm_to_vmem [thread:$0]  %s9, 2304, %s311, [#allocation8], 256, 256, 16
        $region48: #{tpu_custom_call.1} parent=11 // pred_fallthru
          _
      $region12: #{tpu_custom_call.1} parent=5 // pred_fallthru
        _
      %p317 = scmp.lt.s32.totalorder %s24, 2
      // Predicated region
      $region49: #{tpu_custom_call.1} parent=5 // pred_check
        %p318 = pneg %p317
      $region50: #{tpu_custom_call.1} parent=5 // pred_check_branch
        %320 = sbr.rel (%p318) target = $region52
      $region51: #{tpu_custom_call.1} parent=5 // pred_region
        // Predicated region
        $region53: #{tpu_custom_call.1} parent=51 // pred_check
          %p321 = pneg %p44
        $region54: #{tpu_custom_call.1} parent=51 // pred_check_branch
          %323 = sbr.rel (%p321) target = $region56
        $region55: #{tpu_custom_call.1} parent=51 // pred_region
          %s324 = sand.u32 %s34, 1
          %s325 = scalar_lea.sflag [#allocation5], %s324
          %s326 = sand.u32 %s34, 1
          %s327 = smul.addr %s326, 64
          %s328 = scalar_lea.vmem [#allocation4], %s327
          %s330 = ssub.s32 1024, 1024
          %331 = vsyncadd %s325, %s330
          %s332 = smul.addr %s24, 8
          %s333 = smul.addr %s332, 128
          %s334 = scalar_lea.hbm %s0, %s333
          %s335 = sshll.u32 %s328, 4
          %s336 = int_to_ptr.vmem [resolvable:$true] %s335
          %341 = dma.hbm_to_vmem [thread:$0]  %s334, 1024, %s336, %s325, 256, 256, 16
        $region56: #{tpu_custom_call.1} parent=51 // pred_fallthru
          _
      $region52: #{tpu_custom_call.1} parent=5 // pred_fallthru
        _
      %p342 = scmp.le.s32.totalorder 1, %s24
      %p343 = scmp.lt.s32.totalorder %s24, 3
      %p344 = pnand %p342, %p343
      %p345 = pneg %p344
      // Predicated region
      $region57: #{tpu_custom_call.1} parent=5 // pred_check
        _
      $region58: #{tpu_custom_call.1} parent=5 // pred_check_branch
        %347 = sbr.rel (%p344) target = $region60
      $region59: #{tpu_custom_call.1} parent=5 // pred_region
        %s348 = ssub.s32 %s24, 1
        %s349 = sand.u32 %s37, 1
        %s350 = scalar_lea.sflag [#allocation5], %s349
        %s351 = sand.u32 %s37, 1
        %s352 = smul.addr %s351, 64
        %s353 = scalar_lea.vmem [#allocation4], %s352
        // Predicated region
        $region61: #{tpu_custom_call.1} parent=59 // pred_check
          %p354 = pneg %p50
        $region62: #{tpu_custom_call.1} parent=59 // pred_check_branch
          %356 = sbr.rel (%p354) target = $region64
        $region63: #{tpu_custom_call.1} parent=59 // pred_region
          %357 = dma.done %s350, 1024
        $region64: #{tpu_custom_call.1} parent=59 // pred_fallthru
          _
        // Predicated region
        $region65: #{tpu_custom_call.1} parent=59 // pred_check
          %p358 = pneg %p239
        $region66: #{tpu_custom_call.1} parent=59 // pred_check_branch
          %360 = sbr.rel (%p358) target = $region68
        $region67: #{tpu_custom_call.1} parent=59 // pred_region
          %361 = dma.done [#allocation8], 2304
        $region68: #{tpu_custom_call.1} parent=59 // pred_fallthru
          _
        %s362 = sand.u32 %s37, 1
        %s363 = scalar_lea.sflag [#allocation5], %s362
        %s364 = sand.u32 %s37, 1
        %s365 = smul.addr %s364, 64
        %s366 = scalar_lea.vmem [#allocation4], %s365
        %p367 = pneg %p50
        %p368 = pneg %p47
        %p369 = pneg %p71
        %p370 = pneg %p68
        %p371 = pneg %p92
        %p372 = pneg %p89
        %p373 = pneg %p113
        %p374 = pneg %p110
        %p375 = pneg %p134
        %p376 = pneg %p131
        %p377 = pneg %p155
        %p378 = pneg %p152
        %p379 = pneg %p176
        %p380 = pneg %p173
        %p381 = pneg %p197
        %p382 = pneg %p194
        %p383 = pneg %p218
        %p384 = pneg %p215
        %p385 = pneg %p239
        %p386 = pneg %p236
        %p387 = pneg %p265
        %p388 = pneg %p262
        %s389 = sand.u32 %s252, 1
        %s390 = scalar_lea.sflag [#allocation6], %s389
        %s391 = sand.u32 %s252, 1
        %s392 = smul.addr %s391, 64
        %s393 = scalar_lea.vmem [#allocation9], %s392
        %v394 = vld [vmem:[%s1] sm:$0xff]
        %v395 = vld [vmem:[%s3] sm:$0xff]
        %v396 = vld [vmem:[%s5] sm:$0xff]
        %v397 = vld [vmem:[%s2] sm:$0xff]
        %v398 = vld [vmem:[%s4] sm:$0xff]
        %v399 = vld [vmem:[%s6] sm:$0xff]
        %v400 = vld [vmem:[%s7] sm:$0xff]
        %s401 = sld [smem:[#allocation3]]
        %s402 = smul.u32 0, 8
        %s403 = smul.addr %s402, 8
        %s404 = scalar_lea.vmem %s353, %s403 [#allocation4]
        %v405 = vld [vmem:[%s404] sm:$0xff]
        %v406 = vld [vmem:[%s404 + $0x8] sm:$0xff]
        %v407 = vld [vmem:[%s404 + $0x10] sm:$0xff]
        %v408 = vld [vmem:[%s404 + $0x18] sm:$0xff]
        %v409 = vld [vmem:[%s404 + $0x20] sm:$0xff]
        %v410 = vld [vmem:[%s404 + $0x28] sm:$0xff]
        %v411 = vld [vmem:[%s404 + $0x30] sm:$0xff]
        %v412 = vld [vmem:[%s404 + $0x38] sm:$0xff]
        %414 = vset.pattern.permute.xlu0 0
        %415 = vperm.xlu0 %414, %v397
        %v416 = vpop.permute.xlu0 %415
        %vm418 = vcmask 261120
        %v420 = vsel %vm418, %v394, 0
        %422 = vmatprep.subr.mxu0 0.0
        %423 = vmatpush1.msra.mxu0 0.0
        %424 = vmatprep.subr.mxu0 0.0
        %425 = vmatpush1.msra.mxu0 0.0
        %426 = vmatprep.subr.mxu0 0.0
        %427 = vmatpush1.msra.mxu0 0.0
        %428 = vmatprep.subr.mxu0 0.0
        %429 = vmatpush1.msra.mxu0 0.0
        %430 = vmatprep.subr.mxu0 0.0
        %431 = vmatpush1.msra.mxu0 0.0
        %432 = vmatprep.subr.mxu0 0.0
        %433 = vmatpush1.msra.mxu0 0.0
        %434 = vmatprep.subr.mxu0 0.0
        %435 = vmatpush1.msra.mxu0 0.0
        %436 = vmatprep.subr.mxu0 0.0
        %437 = vmatpush1.msra.mxu0 0.0
        %438 = vmatprep.subr.mxu0 0.0
        %439 = vmatpush1.msra.mxu0 0.0
        %440 = vmatprep.subr.mxu0 0.0
        %441 = vmatpush1.msra.mxu0 0.0
        %442 = vmatprep.subr.mxu0 0.0
        %443 = vmatpush1.msra.mxu0 0.0
        %444 = vmatprep.subr.mxu0 0.0
        %445 = vmatpush1.msra.mxu0 0.0
        %446 = vmatprep.subr.mxu0 %v412
        %447 = vmatpush1.msra.mxu0 %v411
        %448 = vmatprep.subr.mxu0 %v410
        %449 = vmatpush1.msra.mxu0 %v409
        %450 = vmatprep.subr.mxu0 %v408
        %451 = vmatpush1.msra.mxu0 %v407
        %452 = vmatprep.subr.mxu0 %v406
        %453 = vmatpush1.msra.mxu0 %v405
        %454 = vmatprep.subr.mxu0 0.0
        %455 = vmatpush2.msra.mxu0 0.0
        %456 = vmatprep.subr.mxu0 0.0
        %457 = vmatpush2.msra.mxu0 0.0
        %458 = vmatprep.subr.mxu0 0.0
        %459 = vmatpush2.msra.mxu0 0.0
        %460 = vmatprep.subr.mxu0 0.0
        %461 = vmatpush2.msra.mxu0 0.0
        %462 = vmatprep.subr.mxu0 0.0
        %463 = vmatpush2.msra.mxu0 0.0
        %464 = vmatprep.subr.mxu0 0.0
        %465 = vmatpush2.msra.mxu0 0.0
        %466 = vmatprep.subr.mxu0 0.0
        %467 = vmatpush2.msra.mxu0 0.0
        %468 = vmatprep.subr.mxu0 0.0
        %469 = vmatpush2.msra.mxu0 0.0
        %470 = vmatprep.subr.mxu0 0.0
        %471 = vmatpush2.msra.mxu0 0.0
        %472 = vmatprep.subr.mxu0 0.0
        %473 = vmatpush2.msra.mxu0 0.0
        %474 = vmatprep.subr.mxu0 0.0
        %475 = vmatpush2.msra.mxu0 0.0
        %476 = vmatprep.subr.mxu0 0.0
        %477 = vmatpush2.msra.mxu0 0.0
        %478 = vmatprep.subr.mxu0 0.0
        %479 = vmatpush2.msra.mxu0 0.0
        %480 = vmatprep.subr.mxu0 0.0
        %481 = vmatpush2.msra.mxu0 0.0
        %482 = vmatprep.subr.mxu0 0.0
        %483 = vmatpush2.msra.mxu0 0.0
        %484 = vmatprep.subr.mxu0 0.0
        %485 = vmatpush2.msra.mxu0 0.0
        %486 = vmatprep.mubr.f32.mxu0 0.0
        %487 = vmatmul.mubr.f32.gmra.mxu0 %v420
        %v488 = vpop.f32.mrf.mxu0
        %v489 = vadd.f32 %v416, %v488
        %v490 = vpop.f32.mrf.mxu0
        %v491 = vadd.f32 %v416, %v490
        %492 = vdwg.mxu0
        %v493 = vmax.f32 %v489, 0.0
        %v494 = vmax.f32 %v491, 0.0
        %495 = vrot.lane.b32.xlu0 %v493, 68
        %v496 = vpop.permute.xlu0 %495
        %497 = vrot.lane.b32.xlu0 %v494, 68
        %v498 = vpop.permute.xlu0 %497
        %v499 = vlaneseq
        %v500 = vand.u32 %v499, 127
        %vm501 = vcmp.lt.s32.totalorder %v500, 68
        %v502 = vsel %vm501, %v496, %v498
        %v503 = vsel %vm501, %v498, %v496
        %v504 = vld [vmem:[#allocation7] sm:$0xff]
        %v505 = vld [vmem:[#allocation7 + $0x8] sm:$0xff]
        %v506 = vmul.f32 %v503, %v504
        %v507 = vmul.f32 %v502, %v505
        %508 = vst [vmem:[#allocation2] sm:$0xff] %v506
        %509 = vst [vmem:[#allocation2 + $0x8] sm:$0xff] %v507
        %510 = vrot.lane.b32.xlu0 %v493, 64
        %v511 = vpop.permute.xlu0 %510
        %512 = vrot.lane.b32.xlu0 %v494, 64
        %v513 = vpop.permute.xlu0 %512
        %vm514 = vcmp.lt.s32.totalorder %v500, 64
        %v515 = vsel %vm514, %v511, %v513
        %v516 = vsel %vm514, %v513, %v511
        %s517 = scalar_lea.vmem [#allocation7], 16
        %v518 = vld [vmem:[%s517] sm:$0xff]
        %v519 = vld [vmem:[%s517 + $0x8] sm:$0xff]
        %v520 = vmul.f32 %v516, %v518
        %v521 = vmul.f32 %v515, %v519
        %522 = vst [vmem:[#allocation2 + $0x10] sm:$0xff] %v520
        %523 = vst [vmem:[#allocation2 + $0x18] sm:$0xff] %v521
        %524 = vrot.lane.b32.xlu0 %v493, 60
        %v525 = vpop.permute.xlu0 %524
        %526 = vrot.lane.b32.xlu0 %v494, 60
        %v527 = vpop.permute.xlu0 %526
        %vm528 = vcmp.lt.s32.totalorder %v500, 60
        %v529 = vsel %vm528, %v525, %v527
        %v530 = vsel %vm528, %v527, %v525
        %s531 = scalar_lea.vmem [#allocation7], 32
        %v532 = vld [vmem:[%s531] sm:$0xff]
        %v533 = vld [vmem:[%s531 + $0x8] sm:$0xff]
        %v534 = vmul.f32 %v530, %v532
        %v535 = vmul.f32 %v529, %v533
        %536 = vst [vmem:[#allocation2 + $0x20] sm:$0xff] %v534
        %537 = vst [vmem:[#allocation2 + $0x28] sm:$0xff] %v535
        %538 = vrot.lane.b32.xlu0 %v493, 4
        %v539 = vpop.permute.xlu0 %538
        %540 = vrot.lane.b32.xlu0 %v494, 4
        %v541 = vpop.permute.xlu0 %540
        %vm542 = vcmp.lt.s32.totalorder %v500, 4
        %v543 = vsel %vm542, %v539, %v541
        %v544 = vsel %vm542, %v541, %v539
        %s545 = scalar_lea.vmem [#allocation7], 48
        %v546 = vld [vmem:[%s545] sm:$0xff]
        %v547 = vld [vmem:[%s545 + $0x8] sm:$0xff]
        %v548 = vmul.f32 %v544, %v546
        %v549 = vmul.f32 %v543, %v547
        %550 = vst [vmem:[#allocation2 + $0x30] sm:$0xff] %v548
        %551 = vst [vmem:[#allocation2 + $0x38] sm:$0xff] %v549
        %552 = vst [vmem:[#allocation2 + $0x40] sm:$0xff] %v493
        %553 = vst [vmem:[#allocation2 + $0x48] sm:$0xff] %v494
        %554 = vrot.lane.b32.xlu0 %v493, 124
        %v555 = vpop.permute.xlu0 %554
        %556 = vrot.lane.b32.xlu0 %v494, 124
        %v557 = vpop.permute.xlu0 %556
        %vm558 = vcmp.lt.s32.totalorder %v500, 124
        %v559 = vsel %vm558, %v555, %v557
        %v560 = vsel %vm558, %v557, %v555
        %s561 = scalar_lea.vmem [#allocation7], 80
        %v562 = vld [vmem:[%s561] sm:$0xff]
        %v563 = vld [vmem:[%s561 + $0x8] sm:$0xff]
        %v564 = vmul.f32 %v559, %v562
        %v565 = vmul.f32 %v560, %v563
        %566 = vst [vmem:[#allocation2 + $0x50] sm:$0xff] %v564
        %567 = vst [vmem:[#allocation2 + $0x58] sm:$0xff] %v565
        %s568 = scalar_lea.vmem [#allocation7], 96
        %v569 = vld [vmem:[%s568] sm:$0xff]
        %v570 = vld [vmem:[%s568 + $0x8] sm:$0xff]
        %v571 = vmul.f32 %v502, %v569
        %v572 = vmul.f32 %v503, %v570
        %573 = vst [vmem:[#allocation2 + $0x60] sm:$0xff] %v571
        %574 = vst [vmem:[#allocation2 + $0x68] sm:$0xff] %v572
        %s575 = scalar_lea.vmem [#allocation7], 112
        %v576 = vld [vmem:[%s575] sm:$0xff]
        %v577 = vld [vmem:[%s575 + $0x8] sm:$0xff]
        %v578 = vmul.f32 %v515, %v576
        %v579 = vmul.f32 %v516, %v577
        %580 = vst [vmem:[#allocation2 + $0x70] sm:$0xff] %v578
        %581 = vst [vmem:[#allocation2 + $0x78] sm:$0xff] %v579
        %s582 = scalar_lea.vmem [#allocation7], 128
        %v583 = vld [vmem:[%s582] sm:$0xff]
        %v584 = vld [vmem:[%s582 + $0x8] sm:$0xff]
        %v585 = vmul.f32 %v529, %v583
        %v586 = vmul.f32 %v530, %v584
        %587 = vst [vmem:[#allocation2 + $0x80] sm:$0xff] %v585
        %588 = vst [vmem:[#allocation2 + $0x88] sm:$0xff] %v586
        %v589 = vld [vmem:[#allocation2] sm:$0xff]
        %v590 = vld [vmem:[#allocation2 + $0x8] sm:$0xff]
        %v591 = vld [vmem:[#allocation2 + $0x10] sm:$0xff]
        %v592 = vld [vmem:[#allocation2 + $0x18] sm:$0xff]
        %v593 = vld [vmem:[#allocation2 + $0x20] sm:$0xff]
        %v594 = vld [vmem:[#allocation2 + $0x28] sm:$0xff]
        %v595 = vld [vmem:[#allocation2 + $0x30] sm:$0xff]
        %v596 = vld [vmem:[#allocation2 + $0x38] sm:$0xff]
        %v597 = vld [vmem:[#allocation2 + $0x40] sm:$0xff]
        %v598 = vld [vmem:[#allocation2 + $0x48] sm:$0xff]
        %v599 = vld [vmem:[#allocation2 + $0x50] sm:$0xff]
        %v600 = vld [vmem:[#allocation2 + $0x58] sm:$0xff]
        %v601 = vld [vmem:[#allocation2 + $0x60] sm:$0xff]
        %v602 = vld [vmem:[#allocation2 + $0x68] sm:$0xff]
        %v603 = vld [vmem:[#allocation2 + $0x70] sm:$0xff]
        %v604 = vld [vmem:[#allocation2 + $0x78] sm:$0xff]
        %v605 = vld [vmem:[#allocation2 + $0x80] sm:$0xff]
        %v606 = vld [vmem:[#allocation2 + $0x88] sm:$0xff]
        %608 = vset.pattern.permute.xlu0 0
        %609 = vperm.xlu0 %608, %v398
        %v610 = vpop.permute.xlu0 %609
        %vm612 = vcmask 588800
        %v614 = vsel %vm612, %v395, 0
        %616 = vmatprep.subr.mxu0 0.0
        %617 = vmatpush1.msra.mxu0 0.0
        %618 = vmatprep.subr.mxu0 0.0
        %619 = vmatpush1.msra.mxu0 0.0
        %620 = vmatprep.subr.mxu0 0.0
        %621 = vmatpush1.msra.mxu0 0.0
        %622 = vmatprep.subr.mxu0 0.0
        %623 = vmatpush1.msra.mxu0 0.0
        %624 = vmatprep.subr.mxu0 0.0
        %625 = vmatpush1.msra.mxu0 0.0
        %626 = vmatprep.subr.mxu0 0.0
        %627 = vmatpush1.msra.mxu0 0.0
        %628 = vmatprep.subr.mxu0 0.0
        %629 = vmatpush1.msra.mxu0 0.0
        %630 = vmatprep.subr.mxu0 %v606
        %631 = vmatpush1.msra.mxu0 %v605
        %632 = vmatprep.subr.mxu0 %v604
        %633 = vmatpush1.msra.mxu0 %v603
        %634 = vmatprep.subr.mxu0 %v602
        %635 = vmatpush1.msra.mxu0 %v601
        %636 = vmatprep.subr.mxu0 %v600
        %637 = vmatpush1.msra.mxu0 %v599
        %638 = vmatprep.subr.mxu0 %v598
        %639 = vmatpush1.msra.mxu0 %v597
        %640 = vmatprep.subr.mxu0 %v596
        %641 = vmatpush1.msra.mxu0 %v595
        %642 = vmatprep.subr.mxu0 %v594
        %643 = vmatpush1.msra.mxu0 %v593
        %644 = vmatprep.subr.mxu0 %v592
        %645 = vmatpush1.msra.mxu0 %v591
        %646 = vmatprep.subr.mxu0 %v590
        %647 = vmatpush1.msra.mxu0 %v589
        %648 = vmatprep.subr.mxu0 0.0
        %649 = vmatpush2.msra.mxu0 0.0
        %650 = vmatprep.subr.mxu0 0.0
        %651 = vmatpush2.msra.mxu0 0.0
        %652 = vmatprep.subr.mxu0 0.0
        %653 = vmatpush2.msra.mxu0 0.0
        %654 = vmatprep.subr.mxu0 0.0
        %655 = vmatpush2.msra.mxu0 0.0
        %656 = vmatprep.subr.mxu0 0.0
        %657 = vmatpush2.msra.mxu0 0.0
        %658 = vmatprep.subr.mxu0 0.0
        %659 = vmatpush2.msra.mxu0 0.0
        %660 = vmatprep.subr.mxu0 0.0
        %661 = vmatpush2.msra.mxu0 0.0
        %662 = vmatprep.subr.mxu0 0.0
        %663 = vmatpush2.msra.mxu0 0.0
        %664 = vmatprep.subr.mxu0 0.0
        %665 = vmatpush2.msra.mxu0 0.0
        %666 = vmatprep.subr.mxu0 0.0
        %667 = vmatpush2.msra.mxu0 0.0
        %668 = vmatprep.subr.mxu0 0.0
        %669 = vmatpush2.msra.mxu0 0.0
        %670 = vmatprep.subr.mxu0 0.0
        %671 = vmatpush2.msra.mxu0 0.0
        %672 = vmatprep.subr.mxu0 0.0
        %673 = vmatpush2.msra.mxu0 0.0
        %674 = vmatprep.subr.mxu0 0.0
        %675 = vmatpush2.msra.mxu0 0.0
        %676 = vmatprep.subr.mxu0 0.0
        %677 = vmatpush2.msra.mxu0 0.0
        %678 = vmatprep.subr.mxu0 0.0
        %679 = vmatpush2.msra.mxu0 0.0
        %680 = vmatprep.mubr.f32.mxu0 0.0
        %681 = vmatmul.mubr.f32.gmra.mxu0 %v614
        %v682 = vpop.f32.mrf.mxu0
        %v683 = vadd.f32 %v610, %v682
        %v684 = vpop.f32.mrf.mxu0
        %v685 = vadd.f32 %v610, %v684
        %686 = vdwg.mxu0
        %v687 = vmax.f32 %v683, 0.0
        %v688 = vmax.f32 %v685, 0.0
        %689 = vrot.lane.b32.xlu0 %v687, 68
        %v690 = vpop.permute.xlu0 %689
        %691 = vrot.lane.b32.xlu0 %v688, 68
        %v692 = vpop.permute.xlu0 %691
        %v693 = vsel %vm501, %v690, %v692
        %v694 = vsel %vm501, %v692, %v690
        %v695 = vld [vmem:[#allocation7] sm:$0xff]
        %v696 = vld [vmem:[#allocation7 + $0x8] sm:$0xff]
        %v697 = vmul.f32 %v694, %v695
        %v698 = vmul.f32 %v693, %v696
        %699 = vst [vmem:[#allocation2] sm:$0xff] %v697
        %700 = vst [vmem:[#allocation2 + $0x8] sm:$0xff] %v698
        %701 = vrot.lane.b32.xlu0 %v687, 64
        %v702 = vpop.permute.xlu0 %701
        %703 = vrot.lane.b32.xlu0 %v688, 64
        %v704 = vpop.permute.xlu0 %703
        %v705 = vsel %vm514, %v702, %v704
        %v706 = vsel %vm514, %v704, %v702
        %v707 = vld [vmem:[%s517] sm:$0xff]
        %v708 = vld [vmem:[%s517 + $0x8] sm:$0xff]
        %v709 = vmul.f32 %v706, %v707
        %v710 = vmul.f32 %v705, %v708
        %711 = vst [vmem:[#allocation2 + $0x10] sm:$0xff] %v709
        %712 = vst [vmem:[#allocation2 + $0x18] sm:$0xff] %v710
        %713 = vrot.lane.b32.xlu0 %v687, 60
        %v714 = vpop.permute.xlu0 %713
        %715 = vrot.lane.b32.xlu0 %v688, 60
        %v716 = vpop.permute.xlu0 %715
        %v717 = vsel %vm528, %v714, %v716
        %v718 = vsel %vm528, %v716, %v714
        %v719 = vld [vmem:[%s531] sm:$0xff]
        %v720 = vld [vmem:[%s531 + $0x8] sm:$0xff]
        %v721 = vmul.f32 %v718, %v719
        %v722 = vmul.f32 %v717, %v720
        %723 = vst [vmem:[#allocation2 + $0x20] sm:$0xff] %v721
        %724 = vst [vmem:[#allocation2 + $0x28] sm:$0xff] %v722
        %725 = vrot.lane.b32.xlu0 %v687, 4
        %v726 = vpop.permute.xlu0 %725
        %727 = vrot.lane.b32.xlu0 %v688, 4
        %v728 = vpop.permute.xlu0 %727
        %v729 = vsel %vm542, %v726, %v728
        %v730 = vsel %vm542, %v728, %v726
        %v731 = vld [vmem:[%s545] sm:$0xff]
        %v732 = vld [vmem:[%s545 + $0x8] sm:$0xff]
        %v733 = vmul.f32 %v730, %v731
        %v734 = vmul.f32 %v729, %v732
        %735 = vst [vmem:[#allocation2 + $0x30] sm:$0xff] %v733
        %736 = vst [vmem:[#allocation2 + $0x38] sm:$0xff] %v734
        %737 = vst [vmem:[#allocation2 + $0x40] sm:$0xff] %v687
        %738 = vst [vmem:[#allocation2 + $0x48] sm:$0xff] %v688
        %739 = vrot.lane.b32.xlu0 %v687, 124
        %v740 = vpop.permute.xlu0 %739
        %741 = vrot.lane.b32.xlu0 %v688, 124
        %v742 = vpop.permute.xlu0 %741
        %v743 = vsel %vm558, %v740, %v742
        %v744 = vsel %vm558, %v742, %v740
        %v745 = vld [vmem:[%s561] sm:$0xff]
        %v746 = vld [vmem:[%s561 + $0x8] sm:$0xff]
        %v747 = vmul.f32 %v743, %v745
        %v748 = vmul.f32 %v744, %v746
        %749 = vst [vmem:[#allocation2 + $0x50] sm:$0xff] %v747
        %750 = vst [vmem:[#allocation2 + $0x58] sm:$0xff] %v748
        %v751 = vld [vmem:[%s568] sm:$0xff]
        %v752 = vld [vmem:[%s568 + $0x8] sm:$0xff]
        %v753 = vmul.f32 %v693, %v751
        %v754 = vmul.f32 %v694, %v752
        %755 = vst [vmem:[#allocation2 + $0x60] sm:$0xff] %v753
        %756 = vst [vmem:[#allocation2 + $0x68] sm:$0xff] %v754
        %v757 = vld [vmem:[%s575] sm:$0xff]
        %v758 = vld [vmem:[%s575 + $0x8] sm:$0xff]
        %v759 = vmul.f32 %v705, %v757
        %v760 = vmul.f32 %v706, %v758
        %761 = vst [vmem:[#allocation2 + $0x70] sm:$0xff] %v759
        %762 = vst [vmem:[#allocation2 + $0x78] sm:$0xff] %v760
        %v763 = vld [vmem:[%s582] sm:$0xff]
        %v764 = vld [vmem:[%s582 + $0x8] sm:$0xff]
        %v765 = vmul.f32 %v717, %v763
        %v766 = vmul.f32 %v718, %v764
        %767 = vst [vmem:[#allocation2 + $0x80] sm:$0xff] %v765
        %768 = vst [vmem:[#allocation2 + $0x88] sm:$0xff] %v766
        %v769 = vld [vmem:[#allocation2] sm:$0xff]
        %v770 = vld [vmem:[#allocation2 + $0x8] sm:$0xff]
        %v771 = vld [vmem:[#allocation2 + $0x10] sm:$0xff]
        %v772 = vld [vmem:[#allocation2 + $0x18] sm:$0xff]
        %v773 = vld [vmem:[#allocation2 + $0x20] sm:$0xff]
        %v774 = vld [vmem:[#allocation2 + $0x28] sm:$0xff]
        %v775 = vld [vmem:[#allocation2 + $0x30] sm:$0xff]
        %v776 = vld [vmem:[#allocation2 + $0x38] sm:$0xff]
        %v777 = vld [vmem:[#allocation2 + $0x40] sm:$0xff]
        %v778 = vld [vmem:[#allocation2 + $0x48] sm:$0xff]
        %v779 = vld [vmem:[#allocation2 + $0x50] sm:$0xff]
        %v780 = vld [vmem:[#allocation2 + $0x58] sm:$0xff]
        %v781 = vld [vmem:[#allocation2 + $0x60] sm:$0xff]
        %v782 = vld [vmem:[#allocation2 + $0x68] sm:$0xff]
        %v783 = vld [vmem:[#allocation2 + $0x70] sm:$0xff]
        %v784 = vld [vmem:[#allocation2 + $0x78] sm:$0xff]
        %v785 = vld [vmem:[#allocation2 + $0x80] sm:$0xff]
        %v786 = vld [vmem:[#allocation2 + $0x88] sm:$0xff]
        %788 = vset.pattern.permute.xlu0 0
        %789 = vperm.xlu0 %788, %v399
        %v790 = vpop.permute.xlu0 %789
        %v793 = vsel %vm612, %v396, 0
        %795 = vmatprep.subr.mxu0 0.0
        %796 = vmatpush1.msra.mxu0 0.0
        %797 = vmatprep.subr.mxu0 0.0
        %798 = vmatpush1.msra.mxu0 0.0
        %799 = vmatprep.subr.mxu0 0.0
        %800 = vmatpush1.msra.mxu0 0.0
        %801 = vmatprep.subr.mxu0 0.0
        %802 = vmatpush1.msra.mxu0 0.0
        %803 = vmatprep.subr.mxu0 0.0
        %804 = vmatpush1.msra.mxu0 0.0
        %805 = vmatprep.subr.mxu0 0.0
        %806 = vmatpush1.msra.mxu0 0.0
        %807 = vmatprep.subr.mxu0 0.0
        %808 = vmatpush1.msra.mxu0 0.0
        %809 = vmatprep.subr.mxu0 %v786
        %810 = vmatpush1.msra.mxu0 %v785
        %811 = vmatprep.subr.mxu0 %v784
        %812 = vmatpush1.msra.mxu0 %v783
        %813 = vmatprep.subr.mxu0 %v782
        %814 = vmatpush1.msra.mxu0 %v781
        %815 = vmatprep.subr.mxu0 %v780
        %816 = vmatpush1.msra.mxu0 %v779
        %817 = vmatprep.subr.mxu0 %v778
        %818 = vmatpush1.msra.mxu0 %v777
        %819 = vmatprep.subr.mxu0 %v776
        %820 = vmatpush1.msra.mxu0 %v775
        %821 = vmatprep.subr.mxu0 %v774
        %822 = vmatpush1.msra.mxu0 %v773
        %823 = vmatprep.subr.mxu0 %v772
        %824 = vmatpush1.msra.mxu0 %v771
        %825 = vmatprep.subr.mxu0 %v770
        %826 = vmatpush1.msra.mxu0 %v769
        %827 = vmatprep.subr.mxu0 0.0
        %828 = vmatpush2.msra.mxu0 0.0
        %829 = vmatprep.subr.mxu0 0.0
        %830 = vmatpush2.msra.mxu0 0.0
        %831 = vmatprep.subr.mxu0 0.0
        %832 = vmatpush2.msra.mxu0 0.0
        %833 = vmatprep.subr.mxu0 0.0
        %834 = vmatpush2.msra.mxu0 0.0
        %835 = vmatprep.subr.mxu0 0.0
        %836 = vmatpush2.msra.mxu0 0.0
        %837 = vmatprep.subr.mxu0 0.0
        %838 = vmatpush2.msra.mxu0 0.0
        %839 = vmatprep.subr.mxu0 0.0
        %840 = vmatpush2.msra.mxu0 0.0
        %841 = vmatprep.subr.mxu0 0.0
        %842 = vmatpush2.msra.mxu0 0.0
        %843 = vmatprep.subr.mxu0 0.0
        %844 = vmatpush2.msra.mxu0 0.0
        %845 = vmatprep.subr.mxu0 0.0
        %846 = vmatpush2.msra.mxu0 0.0
        %847 = vmatprep.subr.mxu0 0.0
        %848 = vmatpush2.msra.mxu0 0.0
        %849 = vmatprep.subr.mxu0 0.0
        %850 = vmatpush2.msra.mxu0 0.0
        %851 = vmatprep.subr.mxu0 0.0
        %852 = vmatpush2.msra.mxu0 0.0
        %853 = vmatprep.subr.mxu0 0.0
        %854 = vmatpush2.msra.mxu0 0.0
        %855 = vmatprep.subr.mxu0 0.0
        %856 = vmatpush2.msra.mxu0 0.0
        %857 = vmatprep.subr.mxu0 0.0
        %858 = vmatpush2.msra.mxu0 0.0
        %859 = vmatprep.mubr.f32.mxu0 0.0
        %860 = vmatmul.mubr.f32.gmra.mxu0 %v793
        %v861 = vpop.f32.mrf.mxu0
        %v862 = vadd.f32 %v790, %v861
        %v863 = vpop.f32.mrf.mxu0
        %v864 = vadd.f32 %v790, %v863
        %865 = vdwg.mxu0
        %v866 = vmax.f32 %v862, 0.0
        %v867 = vmax.f32 %v864, 0.0
        %869 = vset.pattern.permute.xlu0 0
        %870 = vperm.xlu0 %869, %v400
        %v871 = vpop.permute.xlu0 %870
        %v873 = vmul.f32 %v866, %v871
        %v874 = vmul.f32 %v867, %v871
        %v875 = vrot.slane %v873, 4
        %v876 = vadd.f32 %v873, %v875
        %v877 = vrot.slane %v876, 2
        %v878 = vadd.f32 %v876, %v877
        %v879 = vrot.slane %v878, 1
        %v880 = vadd.f32 %v878, %v879
        %v881 = vrot.slane %v874, 4
        %v882 = vadd.f32 %v874, %v881
        %v883 = vrot.slane %v882, 2
        %v884 = vadd.f32 %v882, %v883
        %v885 = vrot.slane %v884, 1
        %v886 = vadd.f32 %v884, %v885
        %v887 = vstv %s401
        %v888 = vadd.f32 %v880, %v887
        %v889 = vadd.f32 %v886, %v887
        %v890 = vxor.u32 %v888, 2147483648
        %v891 = vxor.u32 %v889, 2147483648
        %v892 = vmul.f32 %v890, 1.442695
        %v893 = vpow.pop %v892
        %v894 = vmul.f32 %v891, 1.442695
        %v895 = vpow.pop %v894
        %v896 = vadd.f32 %v893, 1.0
        %v897 = vadd.f32 %v895, 1.0
        %v898 = vrcp.pop %v896
        %v899 = vmul.f32 1.0, %v898
        %v900 = vrcp.pop %v897
        %v901 = vmul.f32 1.0, %v900
        %v902 = vadd.f32 %v899, 1.0
        %v903 = vadd.f32 %v901, 1.0
        %v904 = vmul.f32 %v902, %v405
        %v905 = vmul.f32 %v903, %v406
        %v906 = vmul.f32 %v902, %v407
        %v907 = vmul.f32 %v903, %v408
        %v908 = vmul.f32 %v902, %v409
        %v909 = vmul.f32 %v903, %v410
        %v910 = vmul.f32 %v902, %v411
        %v911 = vmul.f32 %v903, %v412
        %s912 = smul.addr %s402, 8
        %s913 = scalar_lea.vmem %s393, %s912 [#allocation9]
        %914 = vst [vmem:[%s913] sm:$0xff] %v904
        %915 = vst [vmem:[%s913 + $0x8] sm:$0xff] %v905
        %916 = vst [vmem:[%s913 + $0x10] sm:$0xff] %v906
        %917 = vst [vmem:[%s913 + $0x18] sm:$0xff] %v907
        %918 = vst [vmem:[%s913 + $0x20] sm:$0xff] %v908
        %919 = vst [vmem:[%s913 + $0x28] sm:$0xff] %v909
        %920 = vst [vmem:[%s913 + $0x30] sm:$0xff] %v910
        %921 = vst [vmem:[%s913 + $0x38] sm:$0xff] %v911
        %s922 = sand.u32 %s252, 1
        %s923 = scalar_lea.sflag [#allocation6], %s922
        %s924 = sand.u32 %s252, 1
        %s925 = smul.addr %s924, 64
        %s926 = scalar_lea.vmem [#allocation9], %s925
        // Predicated region
        $region69: #{tpu_custom_call.1} parent=59 // pred_check
          %p927 = pneg %p262
        $region70: #{tpu_custom_call.1} parent=59 // pred_check_branch
          %929 = sbr.rel (%p927) target = $region72
        $region71: #{tpu_custom_call.1} parent=59 // pred_region
          %s931 = ssub.s32 1024, 1024
          %932 = vsyncadd %s923, %s931
          %s933 = smul.addr %s29, 8
          %s934 = smul.addr %s933, 128
          %s935 = scalar_lea.hbm %s10, %s934
          %s936 = sshll.u32 %s926, 4
          %s937 = int_to_ptr.vmem [resolvable:$true] %s936
          %942 = dma.vmem_to_hbm [thread:$0]  %s937, 1024, %s935, %s923, 256, 256, 16
        $region72: #{tpu_custom_call.1} parent=59 // pred_fallthru
          _
      $region60: #{tpu_custom_call.1} parent=5 // pred_fallthru
        _
      %p943 = scmp.le.s32.totalorder 2, %s24
      // Predicated region
      $region73: #{tpu_custom_call.1} parent=5 // pred_check
        %p944 = pneg %p943
      $region74: #{tpu_custom_call.1} parent=5 // pred_check_branch
        %946 = sbr.rel (%p944) target = $region76
      $region75: #{tpu_custom_call.1} parent=5 // pred_region
        %s947 = ssub.s32 %s24, 2
        // Predicated region
        $region77: #{tpu_custom_call.1} parent=75 // pred_check
          %p948 = pneg %p268
        $region78: #{tpu_custom_call.1} parent=75 // pred_check_branch
          %950 = sbr.rel (%p948) target = $region80
        $region79: #{tpu_custom_call.1} parent=75 // pred_region
          %s951 = sand.u32 %s253, 1
          %s952 = scalar_lea.sflag [#allocation6], %s951
          %s953 = sand.u32 %s253, 1
          %s954 = smul.addr %s953, 64
          %s955 = scalar_lea.vmem [#allocation9], %s954
          %956 = dma.done %s952, 1024
        $region80: #{tpu_custom_call.1} parent=75 // pred_fallthru
          _
      $region76: #{tpu_custom_call.1} parent=5 // pred_fallthru
        _
    $region6: #{tpu_custom_call.1} parent=1 // loop_footer
      %s28 = sadd.s32 1, %s24
    $region7: #{tpu_custom_call.1} parent=1 // loop_footer_branch
      %23 = sbr.rel target = $region3
    $region8: #{tpu_custom_call.1} parent=1 // loop_exit
      _
    %957 = vsyncpa [#allocation5], 1
    %s958 = scalar_lea.sflag [#allocation5], 1
    %959 = vsyncpa %s958, 1
    %960 = vsyncpa [#allocation8], 1
    %961 = vsyncpa [#allocation6], 1
    %s962 = scalar_lea.sflag [#allocation6], 1
    %963 = vsyncpa %s962, 1

</llo_original>
